<compile_context>
chip_gen: v6e
topology: v6e:2x2x1
jax: 0.10.0
libtpu: 0.0.40
codegen_flags: <defaults>
</compile_context>

<pallas_src>
import jax
import jax.numpy as jnp
from jax.experimental import pallas as pl
from jax.experimental.pallas import tpu as pltpu

_MIB = 1024 * 1024


def _round_up(x, m):
    return ((x + m - 1) // m) * m


def _vmem_capacity_bytes():
    """Physical VMEM of the attached TPU generation (fallback: 64 MiB, v7x-sized)."""
    try:
        info = pltpu.get_tpu_info()
        for name in ("vmem_capacity_bytes", "vmem_bytes", "vmem_size_bytes"):
            v = getattr(info, name, None)
            if v:
                return int(v)
    except Exception:
        pass
    return 64 * _MIB


def propogator(state, A, Wr, br, Wz, bz, Wt, bt, *, tm=None,
               dot_dtype=jnp.bfloat16, vmem_limit_bytes=None):
    """state: [N, D] f32, A: [N, N] f32, W*: [2D, D] f32 (pre-transposed
    PyTorch weights), b*: [1, D] f32. Returns [N, D] f32.

    tm=None picks the node-row tile automatically (multiple of 128, floor 128,
    clamped to the generation-keyed VMEM budget); an explicit tm is respected.
    """
    N, D = state.shape
    f32 = jnp.float32
    Np = _round_up(N, 8)       # 8-aligned node count; A is NOT inflated to TM
    Dp = _round_up(D, 128)     # lane-dense hidden dim (unmasked vst output)
    dsize = jnp.dtype(dot_dtype).itemsize

    # Generation-keyed VMEM budget: ~48 MiB on v7x (64 MiB physical), ~100 MiB
    # on v5e/v6e (128 MiB physical), always leaving Mosaic-scratch headroom.
    if vmem_limit_bytes is None:
        cap = _vmem_capacity_bytes()
        vmem_limit_bytes = max(min(cap - 16 * _MIB, 100 * _MIB), 32 * _MIB)
    block_budget = max(vmem_limit_bytes - 8 * _MIB, 16 * _MIB)

    def blocks_bytes(tm_):
        # Residents are counted double-buffered: the Pallas pipeline allocates
        # two buffers per BlockSpec input even for grid-invariant blocks.
        s_rows = _round_up(Np, tm_)
        resident = 2 * ((s_rows * Dp + 6 * Dp * Dp) * dsize + 3 * Dp * 4)
        streamed = 2 * (tm_ * Np * dsize      # A row tile (double-buffered)
                        + tm_ * Dp * 4)       # f32 output tile (double-buffered)
        return resident + streamed

    if tm is not None:
        tm = min(max(8, _round_up(tm, 8)), Np)   # respect an explicit request
    else:
        # Auto: largest multiple-of-128 row tile that fits the budget, floor 128.
        tm = min(1024, _round_up(Np, 128))
        while tm > 128 and blocks_bytes(tm) > block_budget:
            tm -= 128
        # TODO(synk): for very large N*Dp (resident state + weights alone exceed
        # the v7x budget) add a second "arbitrary" grid axis over A's columns
        # with an f32 a0 accumulator + pl.when epilogue instead of shrinking TM.

    S_rows = _round_up(Np, tm)       # state/output rows (>= Np, multiple of tm)
    grid = (S_rows // tm,)

    def prep(x, rows, cols, dtype):
        # Single-pass cast+pad; both steps are skipped when already in shape/dtype.
        if x.dtype != dtype:
            x = x.astype(dtype)
        pr, pc = rows - x.shape[0], cols - x.shape[1]
        if pr or pc:
            x = jnp.pad(x, ((0, pr), (0, pc)))
        return x

    # Zero padding keeps the math exact on real rows/cols: padded A columns and
    # padded state rows are zero, padded Dp columns are sliced off at the end.
    A_p = prep(A, Np, Np, dot_dtype)            # [Np, Np]      streamed
    s_p = prep(state, S_rows, Dp, dot_dtype)    # [S_rows, Dp]  resident

    # Wrapper-side weight re-layout: a0-side halves of r/z/t stacked into one
    # [Dp, 3Dp] matrix and state-side halves of r/z into one [Dp, 2Dp] matrix,
    # so the kernel runs 3 wide MXU matmuls for the gates instead of 6 narrow.
    Wa = jnp.concatenate([prep(Wr[:D], Dp, Dp, dot_dtype),
                          prep(Wz[:D], Dp, Dp, dot_dtype),
                          prep(Wt[:D], Dp, Dp, dot_dtype)], axis=1)     # [Dp, 3Dp]
    Ws_rz = jnp.concatenate([prep(Wr[D:], Dp, Dp, dot_dtype),
                             prep(Wz[D:], Dp, Dp, dot_dtype)], axis=1)  # [Dp, 2Dp]
    Ws_t = prep(Wt[D:], Dp, Dp, dot_dtype)                              # [Dp, Dp]
    b_all = jnp.concatenate([prep(br, 1, Dp, f32),
                             prep(bz, 1, Dp, f32),
                             prep(bt, 1, Dp, f32)], axis=1)             # [1, 3Dp] f32

    def kernel(A_ref, s_ref, wa_ref, ws_rz_ref, ws_t_ref, b_ref, out_ref):
        i = pl.program_id(0)
        A_t = A_ref[...]                                # (tm, Np)  streamed tile
        s_k = s_ref[pl.ds(0, Np), :]                    # (Np, Dp)  K operand of A @ s
        row0 = pl.multiple_of(i * tm, 8)
        s_tile = s_ref[pl.ds(row0, tm), :]              # (tm, Dp)  rows of this tile
        s_f32 = s_tile.astype(jnp.float32)

        # a0 = (A @ state) for this row tile (MXU, f32 accumulate).
        a0 = jnp.dot(A_t, s_k, preferred_element_type=jnp.float32)

        # a0-side of all three gates in one wide matmul: [r | z | t] pre-acts.
        ga = jnp.dot(a0.astype(dot_dtype), wa_ref[...],
                     preferred_element_type=jnp.float32) + b_ref[...]
        # state-side of r and z in one wide matmul.
        gs = jnp.dot(s_tile, ws_rz_ref[...], preferred_element_type=jnp.float32)

        r = jax.nn.sigmoid(ga[:, :Dp] + gs[:, :Dp])
        z = jax.nn.sigmoid(ga[:, Dp:2 * Dp] + gs[:, Dp:])
        h_hat = jnp.tanh(
            ga[:, 2 * Dp:]
            + jnp.dot((r * s_f32).astype(dot_dtype), ws_t_ref[...],
                      preferred_element_type=jnp.float32))

        out_ref[...] = (1.0 - z) * s_f32 + z * h_hat

    out_p = pl.pallas_call(
        kernel,
        out_shape=jax.ShapeDtypeStruct((S_rows, Dp), jnp.float32),
        grid=grid,
        in_specs=[
            pl.BlockSpec((tm, Np), lambda i: (i, 0)),        # A row tile (streams)
            pl.BlockSpec((S_rows, Dp), lambda i: (0, 0)),    # state (resident)
            pl.BlockSpec((Dp, 3 * Dp), lambda i: (0, 0)),    # stacked a0-side gate W
            pl.BlockSpec((Dp, 2 * Dp), lambda i: (0, 0)),    # stacked state-side r/z W
            pl.BlockSpec((Dp, Dp), lambda i: (0, 0)),        # state-side transform W
            pl.BlockSpec((1, 3 * Dp), lambda i: (0, 0)),     # stacked biases (f32)
        ],
        out_specs=pl.BlockSpec((tm, Dp), lambda i: (i, 0)),
        compiler_params=pltpu.CompilerParams(
            dimension_semantics=("parallel",),
            vmem_limit_bytes=int(vmem_limit_bytes),
        ),
    )(A_p, s_p, Wa, Ws_rz, Ws_t, b_all)

    return out_p[:N, :D]


def propogator_ref(state, A, Wr, br, Wz, bz, Wt, bt):
    """Plain-JAX reference mirroring the PyTorch forward (full precision)."""
    hi = jax.lax.Precision.HIGHEST
    a0 = jnp.dot(A, state, precision=hi)
    a = jnp.concatenate([a0, state], axis=1)
    r = jax.nn.sigmoid(jnp.dot(a, Wr, precision=hi) + br)
    z = jax.nn.sigmoid(jnp.dot(a, Wz, precision=hi) + bz)
    joined = jnp.concatenate([a0, r * state], axis=1)
    h_hat = jnp.tanh(jnp.dot(joined, Wt, precision=hi) + bt)
    return (1.0 - z) * state + z * h_hat


def _make_params(key, N, D):
    ks = jax.random.split(key, 8)
    state = jax.random.normal(ks[0], (N, D), dtype=jnp.float32)
    A = jax.random.normal(ks[1], (N, N), dtype=jnp.float32)
    scale = 1.0 / jnp.sqrt(2.0 * D)
    Wr = jax.random.uniform(ks[2], (2 * D, D), jnp.float32, -scale, scale)
    br = jax.random.uniform(ks[3], (1, D), jnp.float32, -scale, scale)
    Wz = jax.random.uniform(ks[4], (2 * D, D), jnp.float32, -scale, scale)
    bz = jax.random.uniform(ks[5], (1, D), jnp.float32, -scale, scale)
    Wt = jax.random.uniform(ks[6], (2 * D, D), jnp.float32, -scale, scale)
    bt = jax.random.uniform(ks[7], (1, D), jnp.float32, -scale, scale)
    return state, A, Wr, br, Wz, bz, Wt, bt


if __name__ == "__main__":
    key = jax.random.PRNGKey(0)
    k_small, k_med = jax.random.split(key)

    # Small shape matching the module's toy usage (N nodes, state_dim D).
    args_s = _make_params(k_small, 8, 32)
    ref_s = propogator_ref(*args_s)

    # Exact f32 matmul path: tight check.
    out_s32 = jax.block_until_ready(propogator(*args_s, dot_dtype=jnp.float32))
    assert out_s32.shape == (8, 32)
    assert jnp.allclose(out_s32, ref_s, atol=1e-3, rtol=1e-3), "f32 small mismatch"

    # Default path (bf16 MXU inputs, f32 accumulate + f32 gate math): loose check.
    out_sbf = jax.block_until_ready(propogator(*args_s))
    assert out_sbf.shape == (8, 32)
    assert jnp.allclose(out_sbf, ref_s, atol=1e-1, rtol=1e-1), "bf16 small mismatch"

    # Medium, non-dividing shape: exercises a multi-step grid, the partial last
    # A/output tile, and the in-kernel state-row slice (grid=(4,), tm=64).
    args_m = _make_params(k_med, 200, 48)
    ref_m = propogator_ref(*args_m)

    out_m32 = jax.block_until_ready(
        propogator(*args_m, tm=64, dot_dtype=jnp.float32))
    assert out_m32.shape == (200, 48)
    assert jnp.allclose(out_m32, ref_m, atol=1e-3, rtol=1e-3), "f32 medium mismatch"

    # Same shape through the auto-tiling path (tm=None -> 256, partial A tile).
    out_m32_auto = jax.block_until_ready(
        propogator(*args_m, dot_dtype=jnp.float32))
    assert jnp.allclose(out_m32_auto, ref_m, atol=1e-3, rtol=1e-3), \
        "f32 auto-tile mismatch"

    # Default bf16 path on the medium shape (sanity; error grows with degree).
    out_mbf = jax.block_until_ready(propogator(*args_m, tm=64))
    assert jnp.allclose(out_mbf, ref_m, atol=2e-1, rtol=2e-1), "bf16 medium mismatch"

    print("KERNEL_OK")
</pallas_src>

<mosaic_0001>
module attributes {stable_mosaic.version = 11 : i64} {
  func.func @kernel(%arg0: i32, %arg1: memref<128x8xf32, #tpu.memory_space<vmem>>, %arg2: memref<128x128xf32, #tpu.memory_space<vmem>>, %arg3: memref<128x384xf32, #tpu.memory_space<vmem>>, %arg4: memref<128x256xf32, #tpu.memory_space<vmem>>, %arg5: memref<128x128xf32, #tpu.memory_space<vmem>>, %arg6: memref<1x384xf32, #tpu.memory_space<vmem>>, %arg7: memref<128x128xf32, #tpu.memory_space<vmem>>) attributes {dimension_semantics = [#tpu.dimension_semantics<parallel>], iteration_bounds = array<i64: 1>, scalar_prefetch = 0 : i64, scratch_operands = 0 : i64, tpu.core_type = #tpu.core_type<tc>, window_params = [{transform_indices = @transform_0, window_bounds = array<i64: 128, 8>}, {pipeline_mode = #tpu.pipeline_mode<synchronous>, transform_indices = @transform_1, window_bounds = array<i64: 128, 128>}, {pipeline_mode = #tpu.pipeline_mode<synchronous>, transform_indices = @transform_2, window_bounds = array<i64: 128, 384>}, {pipeline_mode = #tpu.pipeline_mode<synchronous>, transform_indices = @transform_3, window_bounds = array<i64: 128, 256>}, {pipeline_mode = #tpu.pipeline_mode<synchronous>, transform_indices = @transform_4, window_bounds = array<i64: 128, 128>}, {pipeline_mode = #tpu.pipeline_mode<synchronous>, transform_indices = @transform_5, window_bounds = array<i64: 1, 384>}, {transform_indices = @transform_6, window_bounds = array<i64: 128, 128>}]} {
    %c0 = arith.constant 0 : index
    %c0_0 = arith.constant 0 : index
    %0 = vector.load %arg1[%c0, %c0_0] : memref<128x8xf32, #tpu.memory_space<vmem>>, vector<128x8xf32>
    %c0_1 = arith.constant 0 : index
    %c0_2 = arith.constant 0 : index
    %1 = vector.load %arg2[%c0_1, %c0_2] : memref<128x128xf32, #tpu.memory_space<vmem>>, vector<8x128xf32>
    %c128_i32 = arith.constant 128 : i32
    %2 = arith.muli %arg0, %c128_i32 : i32
    %3 = tpu.assume_multiple %2, 8 : i32
    %4 = arith.index_cast %3 : i32 to index
    %c0_3 = arith.constant 0 : index
    %5 = vector.load %arg2[%4, %c0_3] : memref<128x128xf32, #tpu.memory_space<vmem>>, vector<128x128xf32>
    %cst = arith.constant dense<0.000000e+00> : vector<128x128xf32>
    %6 = tpu.matmul %0, %1, %cst {dimension_numbers = #tpu.dot_dimension_numbers<[1], [0], [0], [1], [0, 0, 1, 1], [], []>} : vector<128x8xf32>, vector<8x128xf32>, vector<128x128xf32> -> vector<128x128xf32>
    %c0_4 = arith.constant 0 : index
    %c0_5 = arith.constant 0 : index
    %7 = vector.load %arg3[%c0_4, %c0_5] : memref<128x384xf32, #tpu.memory_space<vmem>>, vector<128x384xf32>
    %cst_6 = arith.constant dense<0.000000e+00> : vector<128x384xf32>
    %8 = tpu.matmul %6, %7, %cst_6 {dimension_numbers = #tpu.dot_dimension_numbers<[1], [0], [0], [1], [0, 0, 1, 1], [], []>} : vector<128x128xf32>, vector<128x384xf32>, vector<128x384xf32> -> vector<128x384xf32>
    %c0_7 = arith.constant 0 : index
    %c0_8 = arith.constant 0 : index
    %9 = vector.load %arg6[%c0_7, %c0_8] : memref<1x384xf32, #tpu.memory_space<vmem>>, vector<1x384xf32>
    %10 = vector.broadcast %9 : vector<1x384xf32> to vector<128x384xf32>
    %11 = arith.addf %8, %10 : vector<128x384xf32>
    %c0_9 = arith.constant 0 : index
    %c0_10 = arith.constant 0 : index
    %12 = vector.load %arg4[%c0_9, %c0_10] : memref<128x256xf32, #tpu.memory_space<vmem>>, vector<128x256xf32>
    %cst_11 = arith.constant dense<0.000000e+00> : vector<128x256xf32>
    %13 = tpu.matmul %5, %12, %cst_11 {dimension_numbers = #tpu.dot_dimension_numbers<[1], [0], [0], [1], [0, 0, 1, 1], [], []>} : vector<128x128xf32>, vector<128x256xf32>, vector<128x256xf32> -> vector<128x256xf32>
    %14 = vector.extract_strided_slice %11 {offsets = [0, 0], sizes = [128, 128], strides = [1, 1]} : vector<128x384xf32> to vector<128x128xf32>
    %15 = vector.extract_strided_slice %13 {offsets = [0, 0], sizes = [128, 128], strides = [1, 1]} : vector<128x256xf32> to vector<128x128xf32>
    %16 = arith.addf %14, %15 : vector<128x128xf32>
    %17 = arith.negf %16 : vector<128x128xf32>
    %18 = math.exp %17 : vector<128x128xf32>
    %cst_12 = arith.constant 1.000000e+00 : f32
    %19 = vector.broadcast %cst_12 : f32 to vector<128x128xf32>
    %20 = arith.addf %19, %18 : vector<128x128xf32>
    %21 = arith.divf %19, %20 : vector<128x128xf32>
    %22 = vector.extract_strided_slice %11 {offsets = [0, 128], sizes = [128, 128], strides = [1, 1]} : vector<128x384xf32> to vector<128x128xf32>
    %23 = vector.extract_strided_slice %13 {offsets = [0, 128], sizes = [128, 128], strides = [1, 1]} : vector<128x256xf32> to vector<128x128xf32>
    %24 = arith.addf %22, %23 : vector<128x128xf32>
    %25 = arith.negf %24 : vector<128x128xf32>
    %26 = math.exp %25 : vector<128x128xf32>
    %cst_13 = arith.constant 1.000000e+00 : f32
    %27 = vector.broadcast %cst_13 : f32 to vector<128x128xf32>
    %28 = arith.addf %27, %26 : vector<128x128xf32>
    %29 = arith.divf %27, %28 : vector<128x128xf32>
    %30 = vector.extract_strided_slice %11 {offsets = [0, 256], sizes = [128, 128], strides = [1, 1]} : vector<128x384xf32> to vector<128x128xf32>
    %31 = arith.mulf %21, %5 : vector<128x128xf32>
    %c0_14 = arith.constant 0 : index
    %c0_15 = arith.constant 0 : index
    %32 = vector.load %arg5[%c0_14, %c0_15] : memref<128x128xf32, #tpu.memory_space<vmem>>, vector<128x128xf32>
    %cst_16 = arith.constant dense<0.000000e+00> : vector<128x128xf32>
    %33 = tpu.matmul %31, %32, %cst_16 {dimension_numbers = #tpu.dot_dimension_numbers<[1], [0], [0], [1], [0, 0, 1, 1], [], []>} : vector<128x128xf32>, vector<128x128xf32>, vector<128x128xf32> -> vector<128x128xf32>
    %34 = arith.addf %30, %33 : vector<128x128xf32>
    %35 = math.tanh %34 : vector<128x128xf32>
    %cst_17 = arith.constant 1.000000e+00 : f32
    %36 = vector.broadcast %cst_17 : f32 to vector<128x128xf32>
    %37 = arith.subf %36, %29 : vector<128x128xf32>
    %38 = arith.mulf %37, %5 : vector<128x128xf32>
    %39 = arith.mulf %29, %35 : vector<128x128xf32>
    %40 = arith.addf %38, %39 : vector<128x128xf32>
    %c0_18 = arith.constant 0 : index
    %c0_19 = arith.constant 0 : index
    %41 = vector.load %arg7[%c0_18, %c0_19] : memref<128x128xf32, #tpu.memory_space<vmem>>, vector<128x128xf32>
    tpu.vector_store %arg7[%c0_18, %c0_19], %40 {strides = array<i32>} : memref<128x128xf32, #tpu.memory_space<vmem>>, vector<128x128xf32>,
    return
  }
  func.func @transform_0(%arg0: i32) -> (i32, i32) {
    %c0_i32 = arith.constant 0 : i32
    %c0_i32_0 = arith.constant 0 : i32
    return %arg0, %c0_i32 : i32, i32
  }
  func.func @transform_1(%arg0: i32) -> (i32, i32) {
    %c0_i32 = arith.constant 0 : i32
    %c0_i32_0 = arith.constant 0 : i32
    %c0_i32_1 = arith.constant 0 : i32
    return %c0_i32, %c0_i32_0 : i32, i32
  }
  func.func @transform_2(%arg0: i32) -> (i32, i32) {
    %c0_i32 = arith.constant 0 : i32
    %c0_i32_0 = arith.constant 0 : i32
    %c0_i32_1 = arith.constant 0 : i32
    return %c0_i32, %c0_i32_0 : i32, i32
  }
  func.func @transform_3(%arg0: i32) -> (i32, i32) {
    %c0_i32 = arith.constant 0 : i32
    %c0_i32_0 = arith.constant 0 : i32
    %c0_i32_1 = arith.constant 0 : i32
    return %c0_i32, %c0_i32_0 : i32, i32
  }
  func.func @transform_4(%arg0: i32) -> (i32, i32) {
    %c0_i32 = arith.constant 0 : i32
    %c0_i32_0 = arith.constant 0 : i32
    %c0_i32_1 = arith.constant 0 : i32
    return %c0_i32, %c0_i32_0 : i32, i32
  }
  func.func @transform_5(%arg0: i32) -> (i32, i32) {
    %c0_i32 = arith.constant 0 : i32
    %c0_i32_0 = arith.constant 0 : i32
    %c0_i32_1 = arith.constant 0 : i32
    return %c0_i32, %c0_i32_0 : i32, i32
  }
  func.func @transform_6(%arg0: i32) -> (i32, i32) {
    %c0_i32 = arith.constant 0 : i32
    %c0_i32_0 = arith.constant 0 : i32
    return %arg0, %c0_i32 : i32, i32
  }
}

</mosaic_0001>

<llo_original>
// kernel: tpu_custom_call.1
$region0: #{tpu_custom_call.1}
  #allocation0 [shape = 'u32[]', space=smem, size = 0x4, offset = 0x4, fixed_abs, tag = 'smem constant byte address 0x4 - core index']
  #allocation1 [shape = 'u32[144,128]{1,0:T(1,128)}', space=vmem, size = 0x12000, scoped, tag = 'internal scratch']
  %s0 = inlined_call_operand.hbm [shape: f32[8,8], index: 0, kind: input, shape index: {}]
  %s1 = inlined_call_operand.hbm [shape: f32[128,128], index: 1, kind: input, shape index: {}]
  %s2 = inlined_call_operand.hbm [shape: f32[128,384], index: 2, kind: input, shape index: {}]
  %s3 = inlined_call_operand.hbm [shape: f32[128,256], index: 3, kind: input, shape index: {}]
  %s4 = inlined_call_operand.hbm [shape: f32[128,128], index: 4, kind: input, shape index: {}]
  %s5 = inlined_call_operand.vmem [shape: f32[1,384], index: 5, kind: input, shape index: {}]
  %s6 = inlined_call_operand.hbm [shape: f32[128,128], index: 6, kind: output, shape index: {}]
  %s7 = sld [smem:[#allocation0]]
  $region54: #{tpu_custom_call.1} parent=0
    _
  %s9 = ssub.s32 1, %s7
  %s10 = scalar_select 0, %s9, %s7
  $region1: #{tpu_custom_call.1} parent=0
    #allocation2 [shape = 'u8[65536]{0}', space=vmem, size = 0x10000, scoped, tag = 'input window, operand 0, single buffered']
    #allocation3 [shape = 's32[1]{0}', space=sflag, size = 0x4, scoped, tag = 'scoped memory for tpu_custom_call.1']
    #allocation4 [shape = 's32[1]{0}', space=sflag, size = 0x4, scoped, tag = 'scoped memory for tpu_custom_call.1']
    #allocation5 [shape = 'u8[65536]{0}', space=vmem, size = 0x10000, scoped, tag = 'input window, operand 1, single buffered']
    #allocation6 [shape = 's32[1]{0}', space=sflag, size = 0x4, scoped, tag = 'scoped memory for tpu_custom_call.1']
    #allocation7 [shape = 'u8[196608]{0}', space=vmem, size = 0x30000, scoped, tag = 'input window, operand 2, single buffered']
    #allocation8 [shape = 'u8[131072]{0}', space=vmem, size = 0x20000, scoped, tag = 'input window, operand 3, single buffered']
    #allocation9 [shape = 's32[1]{0}', space=sflag, size = 0x4, scoped, tag = 'scoped memory for tpu_custom_call.1']
    #allocation10 [shape = 'u8[65536]{0}', space=vmem, size = 0x10000, scoped, tag = 'input window, operand 4, single buffered']
    #allocation11 [shape = 'u8[65536]{0}', space=vmem, size = 0x10000, scoped, tag = 'output window, operand 0, single buffered']
    %11 = vsyncpa [#allocation3], 0
    %12 = vsyncpa [#allocation6], 0
    %13 = vsyncpa [#allocation9], 0
    %14 = vsyncpa [#allocation4], 0
    // Predicated region
    $region2: #{tpu_custom_call.1} parent=1 // pred_check
      _
    $region3: #{tpu_custom_call.1} parent=1 // pred_check_branch
      %16 = sbr.rel (0) target = $region5
    $region4: #{tpu_custom_call.1} parent=1 // pred_region
      %s18 = ssub.s32 2048, 128
      %19 = vsyncadd [#allocation3], %s18
      %s20 = sshll.u32 [#allocation2], 4
      %s21 = int_to_ptr.vmem [resolvable:$true] %s20
      %26 = dma.hbm_to_vmem [thread:$0]  %s0, 128, %s21, [#allocation3], 128, 128, 8
    $region5: #{tpu_custom_call.1} parent=1 // pred_fallthru
      _
    // Predicated region
    $region6: #{tpu_custom_call.1} parent=1 // pred_check
      _
    $region7: #{tpu_custom_call.1} parent=1 // pred_check_branch
      %28 = sbr.rel (0) target = $region9
    $region8: #{tpu_custom_call.1} parent=1 // pred_region
      %s30 = ssub.s32 2048, 2048
      %31 = vsyncadd [#allocation6], %s30
      %s32 = sshll.u32 [#allocation5], 4
      %s33 = int_to_ptr.vmem [resolvable:$true] %s32
      %38 = dma.hbm_to_vmem [thread:$0]  %s1, 2048, %s33, [#allocation6], 128, 128, 8
    $region9: #{tpu_custom_call.1} parent=1 // pred_fallthru
      _
    // Predicated region
    $region10: #{tpu_custom_call.1} parent=1 // pred_check
      _
    $region11: #{tpu_custom_call.1} parent=1 // pred_check_branch
      %40 = sbr.rel (0) target = $region13
    $region12: #{tpu_custom_call.1} parent=1 // pred_region
      %s42 = ssub.s32 6144, 6144
      %43 = vsyncadd [#allocation6], %s42
      %s44 = sshll.u32 [#allocation7], 4
      %s45 = int_to_ptr.vmem [resolvable:$true] %s44
      %50 = dma.hbm_to_vmem [thread:$0]  %s2, 6144, %s45, [#allocation6], 384, 384, 24
    $region13: #{tpu_custom_call.1} parent=1 // pred_fallthru
      _
    // Predicated region
    $region14: #{tpu_custom_call.1} parent=1 // pred_check
      _
    $region15: #{tpu_custom_call.1} parent=1 // pred_check_branch
      %52 = sbr.rel (0) target = $region17
    $region16: #{tpu_custom_call.1} parent=1 // pred_region
      %s54 = ssub.s32 4096, 4096
      %55 = vsyncadd [#allocation9], %s54
      %s56 = sshll.u32 [#allocation8], 4
      %s57 = int_to_ptr.vmem [resolvable:$true] %s56
      %62 = dma.hbm_to_vmem [thread:$0]  %s3, 4096, %s57, [#allocation9], 256, 256, 16
    $region17: #{tpu_custom_call.1} parent=1 // pred_fallthru
      _
    // Predicated region
    $region18: #{tpu_custom_call.1} parent=1 // pred_check
      _
    $region19: #{tpu_custom_call.1} parent=1 // pred_check_branch
      %64 = sbr.rel (0) target = $region21
    $region20: #{tpu_custom_call.1} parent=1 // pred_region
      %s66 = ssub.s32 2048, 2048
      %67 = vsyncadd [#allocation9], %s66
      %s68 = sshll.u32 [#allocation10], 4
      %s69 = int_to_ptr.vmem [resolvable:$true] %s68
      %74 = dma.hbm_to_vmem [thread:$0]  %s4, 2048, %s69, [#allocation9], 128, 128, 8
    $region21: #{tpu_custom_call.1} parent=1 // pred_fallthru
      _
    // Predicated region
    $region22: #{tpu_custom_call.1} parent=1 // pred_check
      _
    $region23: #{tpu_custom_call.1} parent=1 // pred_check_branch
      %76 = sbr.rel (0) target = $region25
    $region24: #{tpu_custom_call.1} parent=1 // pred_region
      _
    $region25: #{tpu_custom_call.1} parent=1 // pred_fallthru
      _
    // Predicated region
    $region26: #{tpu_custom_call.1} parent=1 // pred_check
      _
    $region27: #{tpu_custom_call.1} parent=1 // pred_check_branch
      %78 = sbr.rel (0) target = $region29
    $region28: #{tpu_custom_call.1} parent=1 // pred_region
      %79 = dma.done [#allocation3], 2048
    $region29: #{tpu_custom_call.1} parent=1 // pred_fallthru
      _
    // Predicated region
    $region30: #{tpu_custom_call.1} parent=1 // pred_check
      _
    $region31: #{tpu_custom_call.1} parent=1 // pred_check_branch
      %81 = sbr.rel (0) target = $region33
    $region32: #{tpu_custom_call.1} parent=1 // pred_region
      %82 = dma.done [#allocation6], 2048
    $region33: #{tpu_custom_call.1} parent=1 // pred_fallthru
      _
    // Predicated region
    $region34: #{tpu_custom_call.1} parent=1 // pred_check
      _
    $region35: #{tpu_custom_call.1} parent=1 // pred_check_branch
      %84 = sbr.rel (0) target = $region37
    $region36: #{tpu_custom_call.1} parent=1 // pred_region
      %85 = dma.done [#allocation6], 6144
    $region37: #{tpu_custom_call.1} parent=1 // pred_fallthru
      _
    // Predicated region
    $region38: #{tpu_custom_call.1} parent=1 // pred_check
      _
    $region39: #{tpu_custom_call.1} parent=1 // pred_check_branch
      %87 = sbr.rel (0) target = $region41
    $region40: #{tpu_custom_call.1} parent=1 // pred_region
      %88 = dma.done [#allocation9], 4096
    $region41: #{tpu_custom_call.1} parent=1 // pred_fallthru
      _
    // Predicated region
    $region42: #{tpu_custom_call.1} parent=1 // pred_check
      _
    $region43: #{tpu_custom_call.1} parent=1 // pred_check_branch
      %90 = sbr.rel (0) target = $region45
    $region44: #{tpu_custom_call.1} parent=1 // pred_region
      %91 = dma.done [#allocation9], 2048
    $region45: #{tpu_custom_call.1} parent=1 // pred_fallthru
      _
    %v92 = vld [vmem:[#allocation2] sm:$0xff]
    %v93 = vld [vmem:[#allocation2 + $0x8] sm:$0xff]
    %v94 = vld [vmem:[#allocation2 + $0x10] sm:$0xff]
    %v95 = vld [vmem:[#allocation2 + $0x18] sm:$0xff]
    %v96 = vld [vmem:[#allocation2 + $0x20] sm:$0xff]
    %v97 = vld [vmem:[#allocation2 + $0x28] sm:$0xff]
    %v98 = vld [vmem:[#allocation2 + $0x30] sm:$0xff]
    %v99 = vld [vmem:[#allocation2 + $0x38] sm:$0xff]
    %v100 = vld [vmem:[#allocation2 + $0x40] sm:$0xff]
    %v101 = vld [vmem:[#allocation2 + $0x48] sm:$0xff]
    %v102 = vld [vmem:[#allocation2 + $0x50] sm:$0xff]
    %v103 = vld [vmem:[#allocation2 + $0x58] sm:$0xff]
    %v104 = vld [vmem:[#allocation2 + $0x60] sm:$0xff]
    %v105 = vld [vmem:[#allocation2 + $0x68] sm:$0xff]
    %v106 = vld [vmem:[#allocation2 + $0x70] sm:$0xff]
    %v107 = vld [vmem:[#allocation2 + $0x78] sm:$0xff]
    %v108 = vld [vmem:[#allocation5] sm:$0xff]
    %s109 = smul.u32 0, 128
    %s110 = scalar_lea.vmem [#allocation5], %s109
    %v111 = vld [vmem:[%s110] sm:$0xff]
    %v112 = vld [vmem:[%s110 + $0x8] sm:$0xff]
    %v113 = vld [vmem:[%s110 + $0x10] sm:$0xff]
    %v114 = vld [vmem:[%s110 + $0x18] sm:$0xff]
    %v115 = vld [vmem:[%s110 + $0x20] sm:$0xff]
    %v116 = vld [vmem:[%s110 + $0x28] sm:$0xff]
    %v117 = vld [vmem:[%s110 + $0x30] sm:$0xff]
    %v118 = vld [vmem:[%s110 + $0x38] sm:$0xff]
    %v119 = vld [vmem:[%s110 + $0x40] sm:$0xff]
    %v120 = vld [vmem:[%s110 + $0x48] sm:$0xff]
    %v121 = vld [vmem:[%s110 + $0x50] sm:$0xff]
    %v122 = vld [vmem:[%s110 + $0x58] sm:$0xff]
    %v123 = vld [vmem:[%s110 + $0x60] sm:$0xff]
    %v124 = vld [vmem:[%s110 + $0x68] sm:$0xff]
    %v125 = vld [vmem:[%s110 + $0x70] sm:$0xff]
    %v126 = vld [vmem:[%s110 + $0x78] sm:$0xff]
    %vm127 = vcmask 64512
    %v129 = vsel %vm127, %v92, 0
    %v132 = vsel %vm127, %v93, 0
    %v135 = vsel %vm127, %v94, 0
    %v138 = vsel %vm127, %v95, 0
    %v141 = vsel %vm127, %v96, 0
    %v144 = vsel %vm127, %v97, 0
    %v147 = vsel %vm127, %v98, 0
    %v150 = vsel %vm127, %v99, 0
    %v153 = vsel %vm127, %v100, 0
    %v156 = vsel %vm127, %v101, 0
    %v159 = vsel %vm127, %v102, 0
    %v162 = vsel %vm127, %v103, 0
    %v165 = vsel %vm127, %v104, 0
    %v168 = vsel %vm127, %v105, 0
    %v171 = vsel %vm127, %v106, 0
    %v174 = vsel %vm127, %v107, 0
    %176 = vmatprep.subr.mxu0 0.0
    %177 = vmatpush1.msra.mxu0 0.0
    %178 = vmatprep.subr.mxu0 0.0
    %179 = vmatpush1.msra.mxu0 0.0
    %180 = vmatprep.subr.mxu0 0.0
    %181 = vmatpush1.msra.mxu0 0.0
    %182 = vmatprep.subr.mxu0 0.0
    %183 = vmatpush1.msra.mxu0 0.0
    %184 = vmatprep.subr.mxu0 0.0
    %185 = vmatpush1.msra.mxu0 0.0
    %186 = vmatprep.subr.mxu0 0.0
    %187 = vmatpush1.msra.mxu0 0.0
    %188 = vmatprep.subr.mxu0 0.0
    %189 = vmatpush1.msra.mxu0 0.0
    %190 = vmatprep.subr.mxu0 0.0
    %191 = vmatpush1.msra.mxu0 0.0
    %192 = vmatprep.subr.mxu0 0.0
    %193 = vmatpush1.msra.mxu0 0.0
    %194 = vmatprep.subr.mxu0 0.0
    %195 = vmatpush1.msra.mxu0 0.0
    %196 = vmatprep.subr.mxu0 0.0
    %197 = vmatpush1.msra.mxu0 0.0
    %198 = vmatprep.subr.mxu0 0.0
    %199 = vmatpush1.msra.mxu0 0.0
    %200 = vmatprep.subr.mxu0 0.0
    %201 = vmatpush1.msra.mxu0 0.0
    %202 = vmatprep.subr.mxu0 0.0
    %203 = vmatpush1.msra.mxu0 0.0
    %204 = vmatprep.subr.mxu0 0.0
    %205 = vmatpush1.msra.mxu0 0.0
    %206 = vmatprep.subr.mxu0 0.0
    %207 = vmatpush1.msra.mxu0 %v108
    %208 = vmatprep.subr.mxu0 0.0
    %209 = vmatpush2.msra.mxu0 0.0
    %210 = vmatprep.subr.mxu0 0.0
    %211 = vmatpush2.msra.mxu0 0.0
    %212 = vmatprep.subr.mxu0 0.0
    %213 = vmatpush2.msra.mxu0 0.0
    %214 = vmatprep.subr.mxu0 0.0
    %215 = vmatpush2.msra.mxu0 0.0
    %216 = vmatprep.subr.mxu0 0.0
    %217 = vmatpush2.msra.mxu0 0.0
    %218 = vmatprep.subr.mxu0 0.0
    %219 = vmatpush2.msra.mxu0 0.0
    %220 = vmatprep.subr.mxu0 0.0
    %221 = vmatpush2.msra.mxu0 0.0
    %222 = vmatprep.subr.mxu0 0.0
    %223 = vmatpush2.msra.mxu0 0.0
    %224 = vmatprep.subr.mxu0 0.0
    %225 = vmatpush2.msra.mxu0 0.0
    %226 = vmatprep.subr.mxu0 0.0
    %227 = vmatpush2.msra.mxu0 0.0
    %228 = vmatprep.subr.mxu0 0.0
    %229 = vmatpush2.msra.mxu0 0.0
    %230 = vmatprep.subr.mxu0 0.0
    %231 = vmatpush2.msra.mxu0 0.0
    %232 = vmatprep.subr.mxu0 0.0
    %233 = vmatpush2.msra.mxu0 0.0
    %234 = vmatprep.subr.mxu0 0.0
    %235 = vmatpush2.msra.mxu0 0.0
    %236 = vmatprep.subr.mxu0 0.0
    %237 = vmatpush2.msra.mxu0 0.0
    %238 = vmatprep.subr.mxu0 0.0
    %239 = vmatpush2.msra.mxu0 0.0
    %240 = vmatprep.mubr.f32.mxu0 0.0
    %241 = vmatmul.mubr.f32.gmra.mxu0 %v129
    %v242 = vpop.f32.mrf.mxu0
    %v243 = vadd.f32 0.0, %v242
    %v244 = vpop.f32.mrf.mxu0
    %245 = vmatprep.mubr.f32.mxu0 0.0
    %246 = vmatmul.mubr.f32.gmra.mxu0 %v132
    %v247 = vpop.f32.mrf.mxu0
    %v248 = vadd.f32 0.0, %v247
    %v249 = vpop.f32.mrf.mxu0
    %250 = vmatprep.mubr.f32.mxu0 0.0
    %251 = vmatmul.mubr.f32.gmra.mxu0 %v135
    %v252 = vpop.f32.mrf.mxu0
    %v253 = vadd.f32 0.0, %v252
    %v254 = vpop.f32.mrf.mxu0
    %255 = vmatprep.mubr.f32.mxu0 0.0
    %256 = vmatmul.mubr.f32.gmra.mxu0 %v138
    %v257 = vpop.f32.mrf.mxu0
    %v258 = vadd.f32 0.0, %v257
    %v259 = vpop.f32.mrf.mxu0
    %260 = vmatprep.mubr.f32.mxu0 0.0
    %261 = vmatmul.mubr.f32.gmra.mxu0 %v141
    %v262 = vpop.f32.mrf.mxu0
    %v263 = vadd.f32 0.0, %v262
    %v264 = vpop.f32.mrf.mxu0
    %265 = vmatprep.mubr.f32.mxu0 0.0
    %266 = vmatmul.mubr.f32.gmra.mxu0 %v144
    %v267 = vpop.f32.mrf.mxu0
    %v268 = vadd.f32 0.0, %v267
    %v269 = vpop.f32.mrf.mxu0
    %270 = vmatprep.mubr.f32.mxu0 0.0
    %271 = vmatmul.mubr.f32.gmra.mxu0 %v147
    %v272 = vpop.f32.mrf.mxu0
    %v273 = vadd.f32 0.0, %v272
    %v274 = vpop.f32.mrf.mxu0
    %275 = vmatprep.mubr.f32.mxu0 0.0
    %276 = vmatmul.mubr.f32.gmra.mxu0 %v150
    %v277 = vpop.f32.mrf.mxu0
    %v278 = vadd.f32 0.0, %v277
    %v279 = vpop.f32.mrf.mxu0
    %280 = vmatprep.mubr.f32.mxu0 0.0
    %281 = vmatmul.mubr.f32.gmra.mxu0 %v153
    %v282 = vpop.f32.mrf.mxu0
    %v283 = vadd.f32 0.0, %v282
    %v284 = vpop.f32.mrf.mxu0
    %285 = vmatprep.mubr.f32.mxu0 0.0
    %286 = vmatmul.mubr.f32.gmra.mxu0 %v156
    %v287 = vpop.f32.mrf.mxu0
    %v288 = vadd.f32 0.0, %v287
    %v289 = vpop.f32.mrf.mxu0
    %290 = vmatprep.mubr.f32.mxu0 0.0
    %291 = vmatmul.mubr.f32.gmra.mxu0 %v159
    %v292 = vpop.f32.mrf.mxu0
    %v293 = vadd.f32 0.0, %v292
    %v294 = vpop.f32.mrf.mxu0
    %295 = vmatprep.mubr.f32.mxu0 0.0
    %296 = vmatmul.mubr.f32.gmra.mxu0 %v162
    %v297 = vpop.f32.mrf.mxu0
    %v298 = vadd.f32 0.0, %v297
    %v299 = vpop.f32.mrf.mxu0
    %300 = vmatprep.mubr.f32.mxu0 0.0
    %301 = vmatmul.mubr.f32.gmra.mxu0 %v165
    %v302 = vpop.f32.mrf.mxu0
    %v303 = vadd.f32 0.0, %v302
    %v304 = vpop.f32.mrf.mxu0
    %305 = vmatprep.mubr.f32.mxu0 0.0
    %306 = vmatmul.mubr.f32.gmra.mxu0 %v168
    %v307 = vpop.f32.mrf.mxu0
    %v308 = vadd.f32 0.0, %v307
    %v309 = vpop.f32.mrf.mxu0
    %310 = vmatprep.mubr.f32.mxu0 0.0
    %311 = vmatmul.mubr.f32.gmra.mxu0 %v171
    %v312 = vpop.f32.mrf.mxu0
    %v313 = vadd.f32 0.0, %v312
    %v314 = vpop.f32.mrf.mxu0
    %315 = vmatprep.mubr.f32.mxu0 0.0
    %316 = vmatmul.mubr.f32.gmra.mxu0 %v174
    %v317 = vpop.f32.mrf.mxu0
    %v318 = vadd.f32 0.0, %v317
    %v319 = vpop.f32.mrf.mxu0
    %320 = vdwg.mxu0
    %v321 = vld [vmem:[#allocation7] sm:$0xff]
    %v322 = vld [vmem:[#allocation7 + $0x8] sm:$0xff]
    %v323 = vld [vmem:[#allocation7 + $0x10] sm:$0xff]
    %v324 = vld [vmem:[#allocation7 + $0x18] sm:$0xff]
    %v325 = vld [vmem:[#allocation7 + $0x20] sm:$0xff]
    %v326 = vld [vmem:[#allocation7 + $0x28] sm:$0xff]
    %v327 = vld [vmem:[#allocation7 + $0x30] sm:$0xff]
    %v328 = vld [vmem:[#allocation7 + $0x38] sm:$0xff]
    %v329 = vld [vmem:[#allocation7 + $0x40] sm:$0xff]
    %v330 = vld [vmem:[#allocation7 + $0x48] sm:$0xff]
    %v331 = vld [vmem:[#allocation7 + $0x50] sm:$0xff]
    %v332 = vld [vmem:[#allocation7 + $0x58] sm:$0xff]
    %v333 = vld [vmem:[#allocation7 + $0x60] sm:$0xff]
    %v334 = vld [vmem:[#allocation7 + $0x68] sm:$0xff]
    %v335 = vld [vmem:[#allocation7 + $0x70] sm:$0xff]
    %v336 = vld [vmem:[#allocation7 + $0x78] sm:$0xff]
    %v337 = vld [vmem:[#allocation7 + $0x80] sm:$0xff]
    %v338 = vld [vmem:[#allocation7 + $0x88] sm:$0xff]
    %v339 = vld [vmem:[#allocation7 + $0x90] sm:$0xff]
    %v340 = vld [vmem:[#allocation7 + $0x98] sm:$0xff]
    %v341 = vld [vmem:[#allocation7 + $0xa0] sm:$0xff]
    %v342 = vld [vmem:[#allocation7 + $0xa8] sm:$0xff]
    %v343 = vld [vmem:[#allocation7 + $0xb0] sm:$0xff]
    %v344 = vld [vmem:[#allocation7 + $0xb8] sm:$0xff]
    %v345 = vld [vmem:[#allocation7 + $0xc0] sm:$0xff]
    %v346 = vld [vmem:[#allocation7 + $0xc8] sm:$0xff]
    %v347 = vld [vmem:[#allocation7 + $0xd0] sm:$0xff]
    %v348 = vld [vmem:[#allocation7 + $0xd8] sm:$0xff]
    %v349 = vld [vmem:[#allocation7 + $0xe0] sm:$0xff]
    %v350 = vld [vmem:[#allocation7 + $0xe8] sm:$0xff]
    %v351 = vld [vmem:[#allocation7 + $0xf0] sm:$0xff]
    %v352 = vld [vmem:[#allocation7 + $0xf8] sm:$0xff]
    %v353 = vld [vmem:[#allocation7 + $0x100] sm:$0xff]
    %v354 = vld [vmem:[#allocation7 + $0x108] sm:$0xff]
    %v355 = vld [vmem:[#allocation7 + $0x110] sm:$0xff]
    %v356 = vld [vmem:[#allocation7 + $0x118] sm:$0xff]
    %v357 = vld [vmem:[#allocation7 + $0x120] sm:$0xff]
    %v358 = vld [vmem:[#allocation7 + $0x128] sm:$0xff]
    %v359 = vld [vmem:[#allocation7 + $0x130] sm:$0xff]
    %v360 = vld [vmem:[#allocation7 + $0x138] sm:$0xff]
    %v361 = vld [vmem:[#allocation7 + $0x140] sm:$0xff]
    %v362 = vld [vmem:[#allocation7 + $0x148] sm:$0xff]
    %v363 = vld [vmem:[#allocation7 + $0x150] sm:$0xff]
    %v364 = vld [vmem:[#allocation7 + $0x158] sm:$0xff]
    %v365 = vld [vmem:[#allocation7 + $0x160] sm:$0xff]
    %v366 = vld [vmem:[#allocation7 + $0x168] sm:$0xff]
    %v367 = vld [vmem:[#allocation7 + $0x170] sm:$0xff]
    %v368 = vld [vmem:[#allocation7 + $0x178] sm:$0xff]
    %v369 = vld [vmem:[%s5] sm:$0x7]
    %v371 = vlaneseq
    %v372 = vshrl.u32 %v371, 7
    %v373 = vsub.s32 0, %v372
    %v374 = vrot.slane %v369, %v373
    %v375 = vlaneseq
    %v376 = vshrl.u32 %v375, 7
    %v377 = vsub.s32 1, %v376
    %v378 = vrot.slane %v369, %v377
    %v379 = vlaneseq
    %v380 = vshrl.u32 %v379, 7
    %v381 = vsub.s32 2, %v380
    %v382 = vrot.slane %v369, %v381
    %386 = vmatprep.subr.mxu0 %v367
    %387 = vmatpush1.msra.mxu0 %v366
    %388 = vmatprep.subr.mxu0 %v364
    %389 = vmatpush1.msra.mxu0 %v363
    %390 = vmatprep.subr.mxu0 %v361
    %391 = vmatpush1.msra.mxu0 %v360
    %392 = vmatprep.subr.mxu0 %v358
    %393 = vmatpush1.msra.mxu0 %v357
    %394 = vmatprep.subr.mxu0 %v355
    %395 = vmatpush1.msra.mxu0 %v354
    %396 = vmatprep.subr.mxu0 %v352
    %397 = vmatpush1.msra.mxu0 %v351
    %398 = vmatprep.subr.mxu0 %v349
    %399 = vmatpush1.msra.mxu0 %v348
    %400 = vmatprep.subr.mxu0 %v346
    %401 = vmatpush1.msra.mxu0 %v345
    %402 = vmatprep.subr.mxu0 %v343
    %403 = vmatpush1.msra.mxu0 %v342
    %404 = vmatprep.subr.mxu0 %v340
    %405 = vmatpush1.msra.mxu0 %v339
    %406 = vmatprep.subr.mxu0 %v337
    %407 = vmatpush1.msra.mxu0 %v336
    %408 = vmatprep.subr.mxu0 %v334
    %409 = vmatpush1.msra.mxu0 %v333
    %410 = vmatprep.subr.mxu0 %v331
    %411 = vmatpush1.msra.mxu0 %v330
    %412 = vmatprep.subr.mxu0 %v328
    %413 = vmatpush1.msra.mxu0 %v327
    %414 = vmatprep.subr.mxu0 %v325
    %415 = vmatpush1.msra.mxu0 %v324
    %416 = vmatprep.subr.mxu0 %v322
    %417 = vmatpush1.msra.mxu0 %v321
    %418 = vmatprep.subr.mxu0 0.0
    %419 = vmatpush2.msra.mxu0 0.0
    %420 = vmatprep.subr.mxu0 0.0
    %421 = vmatpush2.msra.mxu0 0.0
    %422 = vmatprep.subr.mxu0 0.0
    %423 = vmatpush2.msra.mxu0 0.0
    %424 = vmatprep.subr.mxu0 0.0
    %425 = vmatpush2.msra.mxu0 0.0
    %426 = vmatprep.subr.mxu0 0.0
    %427 = vmatpush2.msra.mxu0 0.0
    %428 = vmatprep.subr.mxu0 0.0
    %429 = vmatpush2.msra.mxu0 0.0
    %430 = vmatprep.subr.mxu0 0.0
    %431 = vmatpush2.msra.mxu0 0.0
    %432 = vmatprep.subr.mxu0 0.0
    %433 = vmatpush2.msra.mxu0 0.0
    %434 = vmatprep.subr.mxu0 0.0
    %435 = vmatpush2.msra.mxu0 0.0
    %436 = vmatprep.subr.mxu0 0.0
    %437 = vmatpush2.msra.mxu0 0.0
    %438 = vmatprep.subr.mxu0 0.0
    %439 = vmatpush2.msra.mxu0 0.0
    %440 = vmatprep.subr.mxu0 0.0
    %441 = vmatpush2.msra.mxu0 0.0
    %442 = vmatprep.subr.mxu0 0.0
    %443 = vmatpush2.msra.mxu0 0.0
    %444 = vmatprep.subr.mxu0 0.0
    %445 = vmatpush2.msra.mxu0 0.0
    %446 = vmatprep.subr.mxu0 0.0
    %447 = vmatpush2.msra.mxu0 0.0
    %448 = vmatprep.subr.mxu0 0.0
    %449 = vmatpush2.msra.mxu0 0.0
    %450 = vmatprep.mubr.f32.mxu0 0.0
    %451 = vmatmul.mubr.f32.gmra.mxu0 %v243
    %v452 = vpop.f32.mrf.mxu0
    %v453 = vadd.f32 %v374, %v452
    %v454 = vpop.f32.mrf.mxu0
    %v455 = vadd.f32 %v378, %v454
    %456 = vmatprep.mubr.f32.mxu0 0.0
    %457 = vmatmul.mubr.f32.gmra.mxu0 %v248
    %v458 = vpop.f32.mrf.mxu0
    %v459 = vadd.f32 %v374, %v458
    %v460 = vpop.f32.mrf.mxu0
    %v461 = vadd.f32 %v378, %v460
    %462 = vmatprep.mubr.f32.mxu0 0.0
    %463 = vmatmul.mubr.f32.gmra.mxu0 %v253
    %v464 = vpop.f32.mrf.mxu0
    %v465 = vadd.f32 %v374, %v464
    %v466 = vpop.f32.mrf.mxu0
    %v467 = vadd.f32 %v378, %v466
    %468 = vmatprep.mubr.f32.mxu0 0.0
    %469 = vmatmul.mubr.f32.gmra.mxu0 %v258
    %v470 = vpop.f32.mrf.mxu0
    %v471 = vadd.f32 %v374, %v470
    %v472 = vpop.f32.mrf.mxu0
    %v473 = vadd.f32 %v378, %v472
    %474 = vmatprep.mubr.f32.mxu0 0.0
    %475 = vmatmul.mubr.f32.gmra.mxu0 %v263
    %v476 = vpop.f32.mrf.mxu0
    %v477 = vadd.f32 %v374, %v476
    %v478 = vpop.f32.mrf.mxu0
    %v479 = vadd.f32 %v378, %v478
    %480 = vmatprep.mubr.f32.mxu0 0.0
    %481 = vmatmul.mubr.f32.gmra.mxu0 %v268
    %v482 = vpop.f32.mrf.mxu0
    %v483 = vadd.f32 %v374, %v482
    %v484 = vpop.f32.mrf.mxu0
    %v485 = vadd.f32 %v378, %v484
    %486 = vmatprep.mubr.f32.mxu0 0.0
    %487 = vmatmul.mubr.f32.gmra.mxu0 %v273
    %v488 = vpop.f32.mrf.mxu0
    %v489 = vadd.f32 %v374, %v488
    %v490 = vpop.f32.mrf.mxu0
    %v491 = vadd.f32 %v378, %v490
    %492 = vmatprep.mubr.f32.mxu0 0.0
    %493 = vmatmul.mubr.f32.gmra.mxu0 %v278
    %v494 = vpop.f32.mrf.mxu0
    %v495 = vadd.f32 %v374, %v494
    %v496 = vpop.f32.mrf.mxu0
    %v497 = vadd.f32 %v378, %v496
    %498 = vmatprep.mubr.f32.mxu0 0.0
    %499 = vmatmul.mubr.f32.gmra.mxu0 %v283
    %v500 = vpop.f32.mrf.mxu0
    %v501 = vadd.f32 %v374, %v500
    %v502 = vpop.f32.mrf.mxu0
    %v503 = vadd.f32 %v378, %v502
    %504 = vmatprep.mubr.f32.mxu0 0.0
    %505 = vmatmul.mubr.f32.gmra.mxu0 %v288
    %v506 = vpop.f32.mrf.mxu0
    %v507 = vadd.f32 %v374, %v506
    %v508 = vpop.f32.mrf.mxu0
    %v509 = vadd.f32 %v378, %v508
    %510 = vmatprep.mubr.f32.mxu0 0.0
    %511 = vmatmul.mubr.f32.gmra.mxu0 %v293
    %v512 = vpop.f32.mrf.mxu0
    %v513 = vadd.f32 %v374, %v512
    %v514 = vpop.f32.mrf.mxu0
    %v515 = vadd.f32 %v378, %v514
    %516 = vmatprep.mubr.f32.mxu0 0.0
    %517 = vmatmul.mubr.f32.gmra.mxu0 %v298
    %v518 = vpop.f32.mrf.mxu0
    %v519 = vadd.f32 %v374, %v518
    %v520 = vpop.f32.mrf.mxu0
    %v521 = vadd.f32 %v378, %v520
    %522 = vmatprep.mubr.f32.mxu0 0.0
    %523 = vmatmul.mubr.f32.gmra.mxu0 %v303
    %v524 = vpop.f32.mrf.mxu0
    %v525 = vadd.f32 %v374, %v524
    %v526 = vpop.f32.mrf.mxu0
    %v527 = vadd.f32 %v378, %v526
    %528 = vmatprep.mubr.f32.mxu0 0.0
    %529 = vmatmul.mubr.f32.gmra.mxu0 %v308
    %v530 = vpop.f32.mrf.mxu0
    %v531 = vadd.f32 %v374, %v530
    %v532 = vpop.f32.mrf.mxu0
    %v533 = vadd.f32 %v378, %v532
    %534 = vmatprep.mubr.f32.mxu0 0.0
    %535 = vmatmul.mubr.f32.gmra.mxu0 %v313
    %v536 = vpop.f32.mrf.mxu0
    %v537 = vadd.f32 %v374, %v536
    %v538 = vpop.f32.mrf.mxu0
    %v539 = vadd.f32 %v378, %v538
    %540 = vmatprep.mubr.f32.mxu0 0.0
    %541 = vmatmul.mubr.f32.gmra.mxu0 %v318
    %v542 = vpop.f32.mrf.mxu0
    %v543 = vadd.f32 %v374, %v542
    %v544 = vpop.f32.mrf.mxu0
    %v545 = vadd.f32 %v378, %v544
    %546 = vdwg.mxu0
    %547 = vmatprep.subr.mxu0 0.0
    %548 = vmatpush1.msra.mxu0 %v368
    %549 = vmatprep.subr.mxu0 0.0
    %550 = vmatpush1.msra.mxu0 %v365
    %551 = vmatprep.subr.mxu0 0.0
    %552 = vmatpush1.msra.mxu0 %v362
    %553 = vmatprep.subr.mxu0 0.0
    %554 = vmatpush1.msra.mxu0 %v359
    %555 = vmatprep.subr.mxu0 0.0
    %556 = vmatpush1.msra.mxu0 %v356
    %557 = vmatprep.subr.mxu0 0.0
    %558 = vmatpush1.msra.mxu0 %v353
    %559 = vmatprep.subr.mxu0 0.0
    %560 = vmatpush1.msra.mxu0 %v350
    %561 = vmatprep.subr.mxu0 0.0
    %562 = vmatpush1.msra.mxu0 %v347
    %563 = vmatprep.subr.mxu0 0.0
    %564 = vmatpush1.msra.mxu0 %v344
    %565 = vmatprep.subr.mxu0 0.0
    %566 = vmatpush1.msra.mxu0 %v341
    %567 = vmatprep.subr.mxu0 0.0
    %568 = vmatpush1.msra.mxu0 %v338
    %569 = vmatprep.subr.mxu0 0.0
    %570 = vmatpush1.msra.mxu0 %v335
    %571 = vmatprep.subr.mxu0 0.0
    %572 = vmatpush1.msra.mxu0 %v332
    %573 = vmatprep.subr.mxu0 0.0
    %574 = vmatpush1.msra.mxu0 %v329
    %575 = vmatprep.subr.mxu0 0.0
    %576 = vmatpush1.msra.mxu0 %v326
    %577 = vmatprep.subr.mxu0 0.0
    %578 = vmatpush1.msra.mxu0 %v323
    %579 = vmatprep.subr.mxu0 0.0
    %580 = vmatpush2.msra.mxu0 0.0
    %581 = vmatprep.subr.mxu0 0.0
    %582 = vmatpush2.msra.mxu0 0.0
    %583 = vmatprep.subr.mxu0 0.0
    %584 = vmatpush2.msra.mxu0 0.0
    %585 = vmatprep.subr.mxu0 0.0
    %586 = vmatpush2.msra.mxu0 0.0
    %587 = vmatprep.subr.mxu0 0.0
    %588 = vmatpush2.msra.mxu0 0.0
    %589 = vmatprep.subr.mxu0 0.0
    %590 = vmatpush2.msra.mxu0 0.0
    %591 = vmatprep.subr.mxu0 0.0
    %592 = vmatpush2.msra.mxu0 0.0
    %593 = vmatprep.subr.mxu0 0.0
    %594 = vmatpush2.msra.mxu0 0.0
    %595 = vmatprep.subr.mxu0 0.0
    %596 = vmatpush2.msra.mxu0 0.0
    %597 = vmatprep.subr.mxu0 0.0
    %598 = vmatpush2.msra.mxu0 0.0
    %599 = vmatprep.subr.mxu0 0.0
    %600 = vmatpush2.msra.mxu0 0.0
    %601 = vmatprep.subr.mxu0 0.0
    %602 = vmatpush2.msra.mxu0 0.0
    %603 = vmatprep.subr.mxu0 0.0
    %604 = vmatpush2.msra.mxu0 0.0
    %605 = vmatprep.subr.mxu0 0.0
    %606 = vmatpush2.msra.mxu0 0.0
    %607 = vmatprep.subr.mxu0 0.0
    %608 = vmatpush2.msra.mxu0 0.0
    %609 = vmatprep.subr.mxu0 0.0
    %610 = vmatpush2.msra.mxu0 0.0
    %611 = vmatprep.mubr.f32.mxu0 0.0
    %612 = vmatmul.mubr.f32.gmra.mxu0 %v243
    %v613 = vpop.f32.mrf.mxu0
    %v614 = vadd.f32 %v382, %v613
    %v615 = vpop.f32.mrf.mxu0
    %616 = vmatprep.mubr.f32.mxu0 0.0
    %617 = vmatmul.mubr.f32.gmra.mxu0 %v248
    %v618 = vpop.f32.mrf.mxu0
    %v619 = vadd.f32 %v382, %v618
    %v620 = vpop.f32.mrf.mxu0
    %621 = vmatprep.mubr.f32.mxu0 0.0
    %622 = vmatmul.mubr.f32.gmra.mxu0 %v253
    %v623 = vpop.f32.mrf.mxu0
    %v624 = vadd.f32 %v382, %v623
    %v625 = vpop.f32.mrf.mxu0
    %626 = vmatprep.mubr.f32.mxu0 0.0
    %627 = vmatmul.mubr.f32.gmra.mxu0 %v258
    %v628 = vpop.f32.mrf.mxu0
    %v629 = vadd.f32 %v382, %v628
    %v630 = vpop.f32.mrf.mxu0
    %631 = vmatprep.mubr.f32.mxu0 0.0
    %632 = vmatmul.mubr.f32.gmra.mxu0 %v263
    %v633 = vpop.f32.mrf.mxu0
    %v634 = vadd.f32 %v382, %v633
    %v635 = vpop.f32.mrf.mxu0
    %636 = vmatprep.mubr.f32.mxu0 0.0
    %637 = vmatmul.mubr.f32.gmra.mxu0 %v268
    %v638 = vpop.f32.mrf.mxu0
    %v639 = vadd.f32 %v382, %v638
    %v640 = vpop.f32.mrf.mxu0
    %641 = vmatprep.mubr.f32.mxu0 0.0
    %642 = vmatmul.mubr.f32.gmra.mxu0 %v273
    %v643 = vpop.f32.mrf.mxu0
    %v644 = vadd.f32 %v382, %v643
    %v645 = vpop.f32.mrf.mxu0
    %646 = vmatprep.mubr.f32.mxu0 0.0
    %647 = vmatmul.mubr.f32.gmra.mxu0 %v278
    %v648 = vpop.f32.mrf.mxu0
    %v649 = vadd.f32 %v382, %v648
    %v650 = vpop.f32.mrf.mxu0
    %651 = vmatprep.mubr.f32.mxu0 0.0
    %652 = vmatmul.mubr.f32.gmra.mxu0 %v283
    %v653 = vpop.f32.mrf.mxu0
    %v654 = vadd.f32 %v382, %v653
    %v655 = vpop.f32.mrf.mxu0
    %656 = vmatprep.mubr.f32.mxu0 0.0
    %657 = vmatmul.mubr.f32.gmra.mxu0 %v288
    %v658 = vpop.f32.mrf.mxu0
    %v659 = vadd.f32 %v382, %v658
    %v660 = vpop.f32.mrf.mxu0
    %661 = vmatprep.mubr.f32.mxu0 0.0
    %662 = vmatmul.mubr.f32.gmra.mxu0 %v293
    %v663 = vpop.f32.mrf.mxu0
    %v664 = vadd.f32 %v382, %v663
    %v665 = vpop.f32.mrf.mxu0
    %666 = vmatprep.mubr.f32.mxu0 0.0
    %667 = vmatmul.mubr.f32.gmra.mxu0 %v298
    %v668 = vpop.f32.mrf.mxu0
    %v669 = vadd.f32 %v382, %v668
    %v670 = vpop.f32.mrf.mxu0
    %671 = vmatprep.mubr.f32.mxu0 0.0
    %672 = vmatmul.mubr.f32.gmra.mxu0 %v303
    %v673 = vpop.f32.mrf.mxu0
    %v674 = vadd.f32 %v382, %v673
    %v675 = vpop.f32.mrf.mxu0
    %676 = vmatprep.mubr.f32.mxu0 0.0
    %677 = vmatmul.mubr.f32.gmra.mxu0 %v308
    %v678 = vpop.f32.mrf.mxu0
    %v679 = vadd.f32 %v382, %v678
    %v680 = vpop.f32.mrf.mxu0
    %681 = vmatprep.mubr.f32.mxu0 0.0
    %682 = vmatmul.mubr.f32.gmra.mxu0 %v313
    %v683 = vpop.f32.mrf.mxu0
    %v684 = vadd.f32 %v382, %v683
    %v685 = vpop.f32.mrf.mxu0
    %686 = vmatprep.mubr.f32.mxu0 0.0
    %687 = vmatmul.mubr.f32.gmra.mxu0 %v318
    %v688 = vpop.f32.mrf.mxu0
    %v689 = vadd.f32 %v382, %v688
    %v690 = vpop.f32.mrf.mxu0
    %691 = vdwg.mxu0
    %v692 = vld [vmem:[#allocation8] sm:$0xff]
    %v693 = vld [vmem:[#allocation8 + $0x8] sm:$0xff]
    %v694 = vld [vmem:[#allocation8 + $0x10] sm:$0xff]
    %v695 = vld [vmem:[#allocation8 + $0x18] sm:$0xff]
    %v696 = vld [vmem:[#allocation8 + $0x20] sm:$0xff]
    %v697 = vld [vmem:[#allocation8 + $0x28] sm:$0xff]
    %v698 = vld [vmem:[#allocation8 + $0x30] sm:$0xff]
    %v699 = vld [vmem:[#allocation8 + $0x38] sm:$0xff]
    %v700 = vld [vmem:[#allocation8 + $0x40] sm:$0xff]
    %v701 = vld [vmem:[#allocation8 + $0x48] sm:$0xff]
    %v702 = vld [vmem:[#allocation8 + $0x50] sm:$0xff]
    %v703 = vld [vmem:[#allocation8 + $0x58] sm:$0xff]
    %v704 = vld [vmem:[#allocation8 + $0x60] sm:$0xff]
    %v705 = vld [vmem:[#allocation8 + $0x68] sm:$0xff]
    %v706 = vld [vmem:[#allocation8 + $0x70] sm:$0xff]
    %v707 = vld [vmem:[#allocation8 + $0x78] sm:$0xff]
    %v708 = vld [vmem:[#allocation8 + $0x80] sm:$0xff]
    %v709 = vld [vmem:[#allocation8 + $0x88] sm:$0xff]
    %v710 = vld [vmem:[#allocation8 + $0x90] sm:$0xff]
    %v711 = vld [vmem:[#allocation8 + $0x98] sm:$0xff]
    %v712 = vld [vmem:[#allocation8 + $0xa0] sm:$0xff]
    %v713 = vld [vmem:[#allocation8 + $0xa8] sm:$0xff]
    %v714 = vld [vmem:[#allocation8 + $0xb0] sm:$0xff]
    %v715 = vld [vmem:[#allocation8 + $0xb8] sm:$0xff]
    %v716 = vld [vmem:[#allocation8 + $0xc0] sm:$0xff]
    %v717 = vld [vmem:[#allocation8 + $0xc8] sm:$0xff]
    %v718 = vld [vmem:[#allocation8 + $0xd0] sm:$0xff]
    %v719 = vld [vmem:[#allocation8 + $0xd8] sm:$0xff]
    %v720 = vld [vmem:[#allocation8 + $0xe0] sm:$0xff]
    %v721 = vld [vmem:[#allocation8 + $0xe8] sm:$0xff]
    %v722 = vld [vmem:[#allocation8 + $0xf0] sm:$0xff]
    %v723 = vld [vmem:[#allocation8 + $0xf8] sm:$0xff]
    %724 = vmatprep.subr.mxu0 %v723
    %725 = vmatpush1.msra.mxu0 %v722
    %726 = vmatprep.subr.mxu0 %v721
    %727 = vmatpush1.msra.mxu0 %v720
    %728 = vmatprep.subr.mxu0 %v719
    %729 = vmatpush1.msra.mxu0 %v718
    %730 = vmatprep.subr.mxu0 %v717
    %731 = vmatpush1.msra.mxu0 %v716
    %732 = vmatprep.subr.mxu0 %v715
    %733 = vmatpush1.msra.mxu0 %v714
    %734 = vmatprep.subr.mxu0 %v713
    %735 = vmatpush1.msra.mxu0 %v712
    %736 = vmatprep.subr.mxu0 %v711
    %737 = vmatpush1.msra.mxu0 %v710
    %738 = vmatprep.subr.mxu0 %v709
    %739 = vmatpush1.msra.mxu0 %v708
    %740 = vmatprep.subr.mxu0 %v707
    %741 = vmatpush1.msra.mxu0 %v706
    %742 = vmatprep.subr.mxu0 %v705
    %743 = vmatpush1.msra.mxu0 %v704
    %744 = vmatprep.subr.mxu0 %v703
    %745 = vmatpush1.msra.mxu0 %v702
    %746 = vmatprep.subr.mxu0 %v701
    %747 = vmatpush1.msra.mxu0 %v700
    %748 = vmatprep.subr.mxu0 %v699
    %749 = vmatpush1.msra.mxu0 %v698
    %750 = vmatprep.subr.mxu0 %v697
    %751 = vmatpush1.msra.mxu0 %v696
    %752 = vmatprep.subr.mxu0 %v695
    %753 = vmatpush1.msra.mxu0 %v694
    %754 = vmatprep.subr.mxu0 %v693
    %755 = vmatpush1.msra.mxu0 %v692
    %756 = vmatprep.subr.mxu0 0.0
    %757 = vmatpush2.msra.mxu0 0.0
    %758 = vmatprep.subr.mxu0 0.0
    %759 = vmatpush2.msra.mxu0 0.0
    %760 = vmatprep.subr.mxu0 0.0
    %761 = vmatpush2.msra.mxu0 0.0
    %762 = vmatprep.subr.mxu0 0.0
    %763 = vmatpush2.msra.mxu0 0.0
    %764 = vmatprep.subr.mxu0 0.0
    %765 = vmatpush2.msra.mxu0 0.0
    %766 = vmatprep.subr.mxu0 0.0
    %767 = vmatpush2.msra.mxu0 0.0
    %768 = vmatprep.subr.mxu0 0.0
    %769 = vmatpush2.msra.mxu0 0.0
    %770 = vmatprep.subr.mxu0 0.0
    %771 = vmatpush2.msra.mxu0 0.0
    %772 = vmatprep.subr.mxu0 0.0
    %773 = vmatpush2.msra.mxu0 0.0
    %774 = vmatprep.subr.mxu0 0.0
    %775 = vmatpush2.msra.mxu0 0.0
    %776 = vmatprep.subr.mxu0 0.0
    %777 = vmatpush2.msra.mxu0 0.0
    %778 = vmatprep.subr.mxu0 0.0
    %779 = vmatpush2.msra.mxu0 0.0
    %780 = vmatprep.subr.mxu0 0.0
    %781 = vmatpush2.msra.mxu0 0.0
    %782 = vmatprep.subr.mxu0 0.0
    %783 = vmatpush2.msra.mxu0 0.0
    %784 = vmatprep.subr.mxu0 0.0
    %785 = vmatpush2.msra.mxu0 0.0
    %786 = vmatprep.subr.mxu0 0.0
    %787 = vmatpush2.msra.mxu0 0.0
    %788 = vmatprep.mubr.f32.mxu0 0.0
    %789 = vmatmul.mubr.f32.gmra.mxu0 %v111
    %v790 = vpop.f32.mrf.mxu0
    %v791 = vadd.f32 0.0, %v790
    %v792 = vpop.f32.mrf.mxu0
    %v793 = vadd.f32 0.0, %v792
    %794 = vmatprep.mubr.f32.mxu0 0.0
    %795 = vmatmul.mubr.f32.gmra.mxu0 %v112
    %v796 = vpop.f32.mrf.mxu0
    %v797 = vadd.f32 0.0, %v796
    %v798 = vpop.f32.mrf.mxu0
    %v799 = vadd.f32 0.0, %v798
    %800 = vmatprep.mubr.f32.mxu0 0.0
    %801 = vmatmul.mubr.f32.gmra.mxu0 %v113
    %v802 = vpop.f32.mrf.mxu0
    %v803 = vadd.f32 0.0, %v802
    %v804 = vpop.f32.mrf.mxu0
    %v805 = vadd.f32 0.0, %v804
    %806 = vmatprep.mubr.f32.mxu0 0.0
    %807 = vmatmul.mubr.f32.gmra.mxu0 %v114
    %v808 = vpop.f32.mrf.mxu0
    %v809 = vadd.f32 0.0, %v808
    %v810 = vpop.f32.mrf.mxu0
    %v811 = vadd.f32 0.0, %v810
    %812 = vmatprep.mubr.f32.mxu0 0.0
    %813 = vmatmul.mubr.f32.gmra.mxu0 %v115
    %v814 = vpop.f32.mrf.mxu0
    %v815 = vadd.f32 0.0, %v814
    %v816 = vpop.f32.mrf.mxu0
    %v817 = vadd.f32 0.0, %v816
    %818 = vmatprep.mubr.f32.mxu0 0.0
    %819 = vmatmul.mubr.f32.gmra.mxu0 %v116
    %v820 = vpop.f32.mrf.mxu0
    %v821 = vadd.f32 0.0, %v820
    %v822 = vpop.f32.mrf.mxu0
    %v823 = vadd.f32 0.0, %v822
    %824 = vmatprep.mubr.f32.mxu0 0.0
    %825 = vmatmul.mubr.f32.gmra.mxu0 %v117
    %v826 = vpop.f32.mrf.mxu0
    %v827 = vadd.f32 0.0, %v826
    %v828 = vpop.f32.mrf.mxu0
    %v829 = vadd.f32 0.0, %v828
    %830 = vmatprep.mubr.f32.mxu0 0.0
    %831 = vmatmul.mubr.f32.gmra.mxu0 %v118
    %v832 = vpop.f32.mrf.mxu0
    %v833 = vadd.f32 0.0, %v832
    %v834 = vpop.f32.mrf.mxu0
    %v835 = vadd.f32 0.0, %v834
    %836 = vmatprep.mubr.f32.mxu0 0.0
    %837 = vmatmul.mubr.f32.gmra.mxu0 %v119
    %v838 = vpop.f32.mrf.mxu0
    %v839 = vadd.f32 0.0, %v838
    %v840 = vpop.f32.mrf.mxu0
    %v841 = vadd.f32 0.0, %v840
    %842 = vmatprep.mubr.f32.mxu0 0.0
    %843 = vmatmul.mubr.f32.gmra.mxu0 %v120
    %v844 = vpop.f32.mrf.mxu0
    %v845 = vadd.f32 0.0, %v844
    %v846 = vpop.f32.mrf.mxu0
    %v847 = vadd.f32 0.0, %v846
    %848 = vmatprep.mubr.f32.mxu0 0.0
    %849 = vmatmul.mubr.f32.gmra.mxu0 %v121
    %v850 = vpop.f32.mrf.mxu0
    %v851 = vadd.f32 0.0, %v850
    %v852 = vpop.f32.mrf.mxu0
    %v853 = vadd.f32 0.0, %v852
    %854 = vmatprep.mubr.f32.mxu0 0.0
    %855 = vmatmul.mubr.f32.gmra.mxu0 %v122
    %v856 = vpop.f32.mrf.mxu0
    %v857 = vadd.f32 0.0, %v856
    %v858 = vpop.f32.mrf.mxu0
    %v859 = vadd.f32 0.0, %v858
    %860 = vmatprep.mubr.f32.mxu0 0.0
    %861 = vmatmul.mubr.f32.gmra.mxu0 %v123
    %v862 = vpop.f32.mrf.mxu0
    %v863 = vadd.f32 0.0, %v862
    %v864 = vpop.f32.mrf.mxu0
    %v865 = vadd.f32 0.0, %v864
    %866 = vmatprep.mubr.f32.mxu0 0.0
    %867 = vmatmul.mubr.f32.gmra.mxu0 %v124
    %v868 = vpop.f32.mrf.mxu0
    %v869 = vadd.f32 0.0, %v868
    %v870 = vpop.f32.mrf.mxu0
    %v871 = vadd.f32 0.0, %v870
    %872 = vmatprep.mubr.f32.mxu0 0.0
    %873 = vmatmul.mubr.f32.gmra.mxu0 %v125
    %v874 = vpop.f32.mrf.mxu0
    %v875 = vadd.f32 0.0, %v874
    %v876 = vpop.f32.mrf.mxu0
    %v877 = vadd.f32 0.0, %v876
    %878 = vmatprep.mubr.f32.mxu0 0.0
    %879 = vmatmul.mubr.f32.gmra.mxu0 %v126
    %v880 = vpop.f32.mrf.mxu0
    %v881 = vadd.f32 0.0, %v880
    %v882 = vpop.f32.mrf.mxu0
    %v883 = vadd.f32 0.0, %v882
    %884 = vdwg.mxu0
    %v885 = vadd.f32 %v453, %v791
    %v886 = vadd.f32 %v459, %v797
    %v887 = vadd.f32 %v465, %v803
    %v888 = vadd.f32 %v471, %v809
    %v889 = vadd.f32 %v477, %v815
    %v890 = vadd.f32 %v483, %v821
    %v891 = vadd.f32 %v489, %v827
    %v892 = vadd.f32 %v495, %v833
    %v893 = vadd.f32 %v501, %v839
    %v894 = vadd.f32 %v507, %v845
    %v895 = vadd.f32 %v513, %v851
    %v896 = vadd.f32 %v519, %v857
    %v897 = vadd.f32 %v525, %v863
    %v898 = vadd.f32 %v531, %v869
    %v899 = vadd.f32 %v537, %v875
    %v900 = vadd.f32 %v543, %v881
    %v901 = vxor.u32 %v885, 2147483648
    %v902 = vxor.u32 %v886, 2147483648
    %v903 = vxor.u32 %v887, 2147483648
    %v904 = vxor.u32 %v888, 2147483648
    %v905 = vxor.u32 %v889, 2147483648
    %v906 = vxor.u32 %v890, 2147483648
    %v907 = vxor.u32 %v891, 2147483648
    %v908 = vxor.u32 %v892, 2147483648
    %v909 = vxor.u32 %v893, 2147483648
    %v910 = vxor.u32 %v894, 2147483648
    %v911 = vxor.u32 %v895, 2147483648
    %v912 = vxor.u32 %v896, 2147483648
    %v913 = vxor.u32 %v897, 2147483648
    %v914 = vxor.u32 %v898, 2147483648
    %v915 = vxor.u32 %v899, 2147483648
    %v916 = vxor.u32 %v900, 2147483648
    %v917 = vmul.f32 %v901, 1.442695
    %v918 = vpow.pop %v917
    %v919 = vmul.f32 %v902, 1.442695
    %v920 = vpow.pop %v919
    %v921 = vmul.f32 %v903, 1.442695
    %v922 = vpow.pop %v921
    %v923 = vmul.f32 %v904, 1.442695
    %v924 = vpow.pop %v923
    %v925 = vmul.f32 %v905, 1.442695
    %v926 = vpow.pop %v925
    %v927 = vmul.f32 %v906, 1.442695
    %v928 = vpow.pop %v927
    %v929 = vmul.f32 %v907, 1.442695
    %v930 = vpow.pop %v929
    %v931 = vmul.f32 %v908, 1.442695
    %v932 = vpow.pop %v931
    %v933 = vmul.f32 %v909, 1.442695
    %v934 = vpow.pop %v933
    %v935 = vmul.f32 %v910, 1.442695
    %v936 = vpow.pop %v935
    %v937 = vmul.f32 %v911, 1.442695
    %v938 = vpow.pop %v937
    %v939 = vmul.f32 %v912, 1.442695
    %v940 = vpow.pop %v939
    %v941 = vmul.f32 %v913, 1.442695
    %v942 = vpow.pop %v941
    %v943 = vmul.f32 %v914, 1.442695
    %v944 = vpow.pop %v943
    %v945 = vmul.f32 %v915, 1.442695
    %v946 = vpow.pop %v945
    %v947 = vmul.f32 %v916, 1.442695
    %v948 = vpow.pop %v947
    %v949 = vadd.f32 %v918, 1.0
    %v950 = vadd.f32 %v920, 1.0
    %v951 = vadd.f32 %v922, 1.0
    %v952 = vadd.f32 %v924, 1.0
    %v953 = vadd.f32 %v926, 1.0
    %v954 = vadd.f32 %v928, 1.0
    %v955 = vadd.f32 %v930, 1.0
    %v956 = vadd.f32 %v932, 1.0
    %v957 = vadd.f32 %v934, 1.0
    %v958 = vadd.f32 %v936, 1.0
    %v959 = vadd.f32 %v938, 1.0
    %v960 = vadd.f32 %v940, 1.0
    %v961 = vadd.f32 %v942, 1.0
    %v962 = vadd.f32 %v944, 1.0
    %v963 = vadd.f32 %v946, 1.0
    %v964 = vadd.f32 %v948, 1.0
    %v965 = vrcp.pop %v949
    %v966 = vmul.f32 1.0, %v965
    %v967 = vrcp.pop %v950
    %v968 = vmul.f32 1.0, %v967
    %v969 = vrcp.pop %v951
    %v970 = vmul.f32 1.0, %v969
    %v971 = vrcp.pop %v952
    %v972 = vmul.f32 1.0, %v971
    %v973 = vrcp.pop %v953
    %v974 = vmul.f32 1.0, %v973
    %v975 = vrcp.pop %v954
    %v976 = vmul.f32 1.0, %v975
    %v977 = vrcp.pop %v955
    %v978 = vmul.f32 1.0, %v977
    %v979 = vrcp.pop %v956
    %v980 = vmul.f32 1.0, %v979
    %v981 = vrcp.pop %v957
    %v982 = vmul.f32 1.0, %v981
    %v983 = vrcp.pop %v958
    %v984 = vmul.f32 1.0, %v983
    %v985 = vrcp.pop %v959
    %v986 = vmul.f32 1.0, %v985
    %v987 = vrcp.pop %v960
    %v988 = vmul.f32 1.0, %v987
    %v989 = vrcp.pop %v961
    %v990 = vmul.f32 1.0, %v989
    %v991 = vrcp.pop %v962
    %v992 = vmul.f32 1.0, %v991
    %v993 = vrcp.pop %v963
    %v994 = vmul.f32 1.0, %v993
    %v995 = vrcp.pop %v964
    %v996 = vmul.f32 1.0, %v995
    %v997 = vadd.f32 %v455, %v793
    %v998 = vadd.f32 %v461, %v799
    %v999 = vadd.f32 %v467, %v805
    %v1000 = vadd.f32 %v473, %v811
    %v1001 = vadd.f32 %v479, %v817
    %v1002 = vadd.f32 %v485, %v823
    %v1003 = vadd.f32 %v491, %v829
    %v1004 = vadd.f32 %v497, %v835
    %v1005 = vadd.f32 %v503, %v841
    %v1006 = vadd.f32 %v509, %v847
    %v1007 = vadd.f32 %v515, %v853
    %v1008 = vadd.f32 %v521, %v859
    %v1009 = vadd.f32 %v527, %v865
    %v1010 = vadd.f32 %v533, %v871
    %v1011 = vadd.f32 %v539, %v877
    %v1012 = vadd.f32 %v545, %v883
    %v1013 = vxor.u32 %v997, 2147483648
    %v1014 = vxor.u32 %v998, 2147483648
    %v1015 = vxor.u32 %v999, 2147483648
    %v1016 = vxor.u32 %v1000, 2147483648
    %v1017 = vxor.u32 %v1001, 2147483648
    %v1018 = vxor.u32 %v1002, 2147483648
    %v1019 = vxor.u32 %v1003, 2147483648
    %v1020 = vxor.u32 %v1004, 2147483648
    %v1021 = vxor.u32 %v1005, 2147483648
    %v1022 = vxor.u32 %v1006, 2147483648
    %v1023 = vxor.u32 %v1007, 2147483648
    %v1024 = vxor.u32 %v1008, 2147483648
    %v1025 = vxor.u32 %v1009, 2147483648
    %v1026 = vxor.u32 %v1010, 2147483648
    %v1027 = vxor.u32 %v1011, 2147483648
    %v1028 = vxor.u32 %v1012, 2147483648
    %v1029 = vmul.f32 %v1013, 1.442695
    %v1030 = vpow.pop %v1029
    %v1031 = vmul.f32 %v1014, 1.442695
    %v1032 = vpow.pop %v1031
    %v1033 = vmul.f32 %v1015, 1.442695
    %v1034 = vpow.pop %v1033
    %v1035 = vmul.f32 %v1016, 1.442695
    %v1036 = vpow.pop %v1035
    %v1037 = vmul.f32 %v1017, 1.442695
    %v1038 = vpow.pop %v1037
    %v1039 = vmul.f32 %v1018, 1.442695
    %v1040 = vpow.pop %v1039
    %v1041 = vmul.f32 %v1019, 1.442695
    %v1042 = vpow.pop %v1041
    %v1043 = vmul.f32 %v1020, 1.442695
    %v1044 = vpow.pop %v1043
    %v1045 = vmul.f32 %v1021, 1.442695
    %v1046 = vpow.pop %v1045
    %v1047 = vmul.f32 %v1022, 1.442695
    %v1048 = vpow.pop %v1047
    %v1049 = vmul.f32 %v1023, 1.442695
    %v1050 = vpow.pop %v1049
    %v1051 = vmul.f32 %v1024, 1.442695
    %v1052 = vpow.pop %v1051
    %v1053 = vmul.f32 %v1025, 1.442695
    %v1054 = vpow.pop %v1053
    %v1055 = vmul.f32 %v1026, 1.442695
    %v1056 = vpow.pop %v1055
    %v1057 = vmul.f32 %v1027, 1.442695
    %v1058 = vpow.pop %v1057
    %v1059 = vmul.f32 %v1028, 1.442695
    %v1060 = vpow.pop %v1059
    %v1061 = vadd.f32 %v1030, 1.0
    %v1062 = vadd.f32 %v1032, 1.0
    %v1063 = vadd.f32 %v1034, 1.0
    %v1064 = vadd.f32 %v1036, 1.0
    %v1065 = vadd.f32 %v1038, 1.0
    %v1066 = vadd.f32 %v1040, 1.0
    %v1067 = vadd.f32 %v1042, 1.0
    %v1068 = vadd.f32 %v1044, 1.0
    %v1069 = vadd.f32 %v1046, 1.0
    %v1070 = vadd.f32 %v1048, 1.0
    %v1071 = vadd.f32 %v1050, 1.0
    %v1072 = vadd.f32 %v1052, 1.0
    %v1073 = vadd.f32 %v1054, 1.0
    %v1074 = vadd.f32 %v1056, 1.0
    %v1075 = vadd.f32 %v1058, 1.0
    %v1076 = vadd.f32 %v1060, 1.0
    %v1077 = vrcp.pop %v1061
    %v1078 = vmul.f32 1.0, %v1077
    %v1079 = vrcp.pop %v1062
    %v1080 = vmul.f32 1.0, %v1079
    %v1081 = vrcp.pop %v1063
    %v1082 = vmul.f32 1.0, %v1081
    %v1083 = vrcp.pop %v1064
    %v1084 = vmul.f32 1.0, %v1083
    %v1085 = vrcp.pop %v1065
    %v1086 = vmul.f32 1.0, %v1085
    %v1087 = vrcp.pop %v1066
    %v1088 = vmul.f32 1.0, %v1087
    %v1089 = vrcp.pop %v1067
    %v1090 = vmul.f32 1.0, %v1089
    %v1091 = vrcp.pop %v1068
    %v1092 = vmul.f32 1.0, %v1091
    %v1093 = vrcp.pop %v1069
    %v1094 = vmul.f32 1.0, %v1093
    %v1095 = vrcp.pop %v1070
    %v1096 = vmul.f32 1.0, %v1095
    %v1097 = vrcp.pop %v1071
    %v1098 = vmul.f32 1.0, %v1097
    %v1099 = vrcp.pop %v1072
    %v1100 = vmul.f32 1.0, %v1099
    %v1101 = vrcp.pop %v1073
    %v1102 = vmul.f32 1.0, %v1101
    %v1103 = vrcp.pop %v1074
    %v1104 = vmul.f32 1.0, %v1103
    %v1105 = vrcp.pop %v1075
    %v1106 = vmul.f32 1.0, %v1105
    %v1107 = vrcp.pop %v1076
    %v1108 = vmul.f32 1.0, %v1107
    %v1109 = vmul.f32 %v966, %v111
    %v1110 = vmul.f32 %v968, %v112
    %v1111 = vmul.f32 %v970, %v113
    %v1112 = vmul.f32 %v972, %v114
    %v1113 = vmul.f32 %v974, %v115
    %v1114 = vmul.f32 %v976, %v116
    %v1115 = vmul.f32 %v978, %v117
    %v1116 = vmul.f32 %v980, %v118
    %v1117 = vmul.f32 %v982, %v119
    %v1118 = vmul.f32 %v984, %v120
    %v1119 = vmul.f32 %v986, %v121
    %v1120 = vmul.f32 %v988, %v122
    %v1121 = vmul.f32 %v990, %v123
    %v1122 = vmul.f32 %v992, %v124
    %v1123 = vmul.f32 %v994, %v125
    %v1124 = vmul.f32 %v996, %v126
    %v1125 = vld [vmem:[#allocation10] sm:$0xff]
    %v1126 = vld [vmem:[#allocation10 + $0x8] sm:$0xff]
    %v1127 = vld [vmem:[#allocation10 + $0x10] sm:$0xff]
    %v1128 = vld [vmem:[#allocation10 + $0x18] sm:$0xff]
    %v1129 = vld [vmem:[#allocation10 + $0x20] sm:$0xff]
    %v1130 = vld [vmem:[#allocation10 + $0x28] sm:$0xff]
    %v1131 = vld [vmem:[#allocation10 + $0x30] sm:$0xff]
    %v1132 = vld [vmem:[#allocation10 + $0x38] sm:$0xff]
    %v1133 = vld [vmem:[#allocation10 + $0x40] sm:$0xff]
    %v1134 = vld [vmem:[#allocation10 + $0x48] sm:$0xff]
    %v1135 = vld [vmem:[#allocation10 + $0x50] sm:$0xff]
    %v1136 = vld [vmem:[#allocation10 + $0x58] sm:$0xff]
    %v1137 = vld [vmem:[#allocation10 + $0x60] sm:$0xff]
    %v1138 = vld [vmem:[#allocation10 + $0x68] sm:$0xff]
    %v1139 = vld [vmem:[#allocation10 + $0x70] sm:$0xff]
    %v1140 = vld [vmem:[#allocation10 + $0x78] sm:$0xff]
    %1141 = vmatprep.subr.mxu0 0.0
    %1142 = vmatpush1.msra.mxu0 %v1140
    %1143 = vmatprep.subr.mxu0 0.0
    %1144 = vmatpush1.msra.mxu0 %v1139
    %1145 = vmatprep.subr.mxu0 0.0
    %1146 = vmatpush1.msra.mxu0 %v1138
    %1147 = vmatprep.subr.mxu0 0.0
    %1148 = vmatpush1.msra.mxu0 %v1137
    %1149 = vmatprep.subr.mxu0 0.0
    %1150 = vmatpush1.msra.mxu0 %v1136
    %1151 = vmatprep.subr.mxu0 0.0
    %1152 = vmatpush1.msra.mxu0 %v1135
    %1153 = vmatprep.subr.mxu0 0.0
    %1154 = vmatpush1.msra.mxu0 %v1134
    %1155 = vmatprep.subr.mxu0 0.0
    %1156 = vmatpush1.msra.mxu0 %v1133
    %1157 = vmatprep.subr.mxu0 0.0
    %1158 = vmatpush1.msra.mxu0 %v1132
    %1159 = vmatprep.subr.mxu0 0.0
    %1160 = vmatpush1.msra.mxu0 %v1131
    %1161 = vmatprep.subr.mxu0 0.0
    %1162 = vmatpush1.msra.mxu0 %v1130
    %1163 = vmatprep.subr.mxu0 0.0
    %1164 = vmatpush1.msra.mxu0 %v1129
    %1165 = vmatprep.subr.mxu0 0.0
    %1166 = vmatpush1.msra.mxu0 %v1128
    %1167 = vmatprep.subr.mxu0 0.0
    %1168 = vmatpush1.msra.mxu0 %v1127
    %1169 = vmatprep.subr.mxu0 0.0
    %1170 = vmatpush1.msra.mxu0 %v1126
    %1171 = vmatprep.subr.mxu0 0.0
    %1172 = vmatpush1.msra.mxu0 %v1125
    %1173 = vmatprep.subr.mxu0 0.0
    %1174 = vmatpush2.msra.mxu0 0.0
    %1175 = vmatprep.subr.mxu0 0.0
    %1176 = vmatpush2.msra.mxu0 0.0
    %1177 = vmatprep.subr.mxu0 0.0
    %1178 = vmatpush2.msra.mxu0 0.0
    %1179 = vmatprep.subr.mxu0 0.0
    %1180 = vmatpush2.msra.mxu0 0.0
    %1181 = vmatprep.subr.mxu0 0.0
    %1182 = vmatpush2.msra.mxu0 0.0
    %1183 = vmatprep.subr.mxu0 0.0
    %1184 = vmatpush2.msra.mxu0 0.0
    %1185 = vmatprep.subr.mxu0 0.0
    %1186 = vmatpush2.msra.mxu0 0.0
    %1187 = vmatprep.subr.mxu0 0.0
    %1188 = vmatpush2.msra.mxu0 0.0
    %1189 = vmatprep.subr.mxu0 0.0
    %1190 = vmatpush2.msra.mxu0 0.0
    %1191 = vmatprep.subr.mxu0 0.0
    %1192 = vmatpush2.msra.mxu0 0.0
    %1193 = vmatprep.subr.mxu0 0.0
    %1194 = vmatpush2.msra.mxu0 0.0
    %1195 = vmatprep.subr.mxu0 0.0
    %1196 = vmatpush2.msra.mxu0 0.0
    %1197 = vmatprep.subr.mxu0 0.0
    %1198 = vmatpush2.msra.mxu0 0.0
    %1199 = vmatprep.subr.mxu0 0.0
    %1200 = vmatpush2.msra.mxu0 0.0
    %1201 = vmatprep.subr.mxu0 0.0
    %1202 = vmatpush2.msra.mxu0 0.0
    %1203 = vmatprep.subr.mxu0 0.0
    %1204 = vmatpush2.msra.mxu0 0.0
    %1205 = vmatprep.mubr.f32.mxu0 0.0
    %1206 = vmatmul.mubr.f32.gmra.mxu0 %v1109
    %v1207 = vpop.f32.mrf.mxu0
    %v1208 = vadd.f32 0.0, %v1207
    %v1209 = vpop.f32.mrf.mxu0
    %1210 = vmatprep.mubr.f32.mxu0 0.0
    %1211 = vmatmul.mubr.f32.gmra.mxu0 %v1110
    %v1212 = vpop.f32.mrf.mxu0
    %v1213 = vadd.f32 0.0, %v1212
    %v1214 = vpop.f32.mrf.mxu0
    %1215 = vmatprep.mubr.f32.mxu0 0.0
    %1216 = vmatmul.mubr.f32.gmra.mxu0 %v1111
    %v1217 = vpop.f32.mrf.mxu0
    %v1218 = vadd.f32 0.0, %v1217
    %v1219 = vpop.f32.mrf.mxu0
    %1220 = vmatprep.mubr.f32.mxu0 0.0
    %1221 = vmatmul.mubr.f32.gmra.mxu0 %v1112
    %v1222 = vpop.f32.mrf.mxu0
    %v1223 = vadd.f32 0.0, %v1222
    %v1224 = vpop.f32.mrf.mxu0
    %1225 = vmatprep.mubr.f32.mxu0 0.0
    %1226 = vmatmul.mubr.f32.gmra.mxu0 %v1113
    %v1227 = vpop.f32.mrf.mxu0
    %v1228 = vadd.f32 0.0, %v1227
    %v1229 = vpop.f32.mrf.mxu0
    %1230 = vmatprep.mubr.f32.mxu0 0.0
    %1231 = vmatmul.mubr.f32.gmra.mxu0 %v1114
    %v1232 = vpop.f32.mrf.mxu0
    %v1233 = vadd.f32 0.0, %v1232
    %v1234 = vpop.f32.mrf.mxu0
    %1235 = vmatprep.mubr.f32.mxu0 0.0
    %1236 = vmatmul.mubr.f32.gmra.mxu0 %v1115
    %v1237 = vpop.f32.mrf.mxu0
    %v1238 = vadd.f32 0.0, %v1237
    %v1239 = vpop.f32.mrf.mxu0
    %1240 = vmatprep.mubr.f32.mxu0 0.0
    %1241 = vmatmul.mubr.f32.gmra.mxu0 %v1116
    %v1242 = vpop.f32.mrf.mxu0
    %v1243 = vadd.f32 0.0, %v1242
    %v1244 = vpop.f32.mrf.mxu0
    %1245 = vmatprep.mubr.f32.mxu0 0.0
    %1246 = vmatmul.mubr.f32.gmra.mxu0 %v1117
    %v1247 = vpop.f32.mrf.mxu0
    %v1248 = vadd.f32 0.0, %v1247
    %v1249 = vpop.f32.mrf.mxu0
    %1250 = vmatprep.mubr.f32.mxu0 0.0
    %1251 = vmatmul.mubr.f32.gmra.mxu0 %v1118
    %v1252 = vpop.f32.mrf.mxu0
    %v1253 = vadd.f32 0.0, %v1252
    %v1254 = vpop.f32.mrf.mxu0
    %1255 = vmatprep.mubr.f32.mxu0 0.0
    %1256 = vmatmul.mubr.f32.gmra.mxu0 %v1119
    %v1257 = vpop.f32.mrf.mxu0
    %v1258 = vadd.f32 0.0, %v1257
    %v1259 = vpop.f32.mrf.mxu0
    %1260 = vmatprep.mubr.f32.mxu0 0.0
    %1261 = vmatmul.mubr.f32.gmra.mxu0 %v1120
    %v1262 = vpop.f32.mrf.mxu0
    %v1263 = vadd.f32 0.0, %v1262
    %v1264 = vpop.f32.mrf.mxu0
    %1265 = vmatprep.mubr.f32.mxu0 0.0
    %1266 = vmatmul.mubr.f32.gmra.mxu0 %v1121
    %v1267 = vpop.f32.mrf.mxu0
    %v1268 = vadd.f32 0.0, %v1267
    %v1269 = vpop.f32.mrf.mxu0
    %1270 = vmatprep.mubr.f32.mxu0 0.0
    %1271 = vmatmul.mubr.f32.gmra.mxu0 %v1122
    %v1272 = vpop.f32.mrf.mxu0
    %v1273 = vadd.f32 0.0, %v1272
    %v1274 = vpop.f32.mrf.mxu0
    %1275 = vmatprep.mubr.f32.mxu0 0.0
    %1276 = vmatmul.mubr.f32.gmra.mxu0 %v1123
    %v1277 = vpop.f32.mrf.mxu0
    %v1278 = vadd.f32 0.0, %v1277
    %v1279 = vpop.f32.mrf.mxu0
    %1280 = vmatprep.mubr.f32.mxu0 0.0
    %1281 = vmatmul.mubr.f32.gmra.mxu0 %v1124
    %v1282 = vpop.f32.mrf.mxu0
    %v1283 = vadd.f32 0.0, %v1282
    %v1284 = vpop.f32.mrf.mxu0
    %1285 = vdwg.mxu0
    %v1286 = vadd.f32 %v614, %v1208
    %v1287 = vadd.f32 %v619, %v1213
    %v1288 = vadd.f32 %v624, %v1218
    %v1289 = vadd.f32 %v629, %v1223
    %v1290 = vadd.f32 %v634, %v1228
    %v1291 = vadd.f32 %v639, %v1233
    %v1292 = vadd.f32 %v644, %v1238
    %v1293 = vadd.f32 %v649, %v1243
    %v1294 = vadd.f32 %v654, %v1248
    %v1295 = vadd.f32 %v659, %v1253
    %v1296 = vadd.f32 %v664, %v1258
    %v1297 = vadd.f32 %v669, %v1263
    %v1298 = vadd.f32 %v674, %v1268
    %v1299 = vadd.f32 %v679, %v1273
    %v1300 = vadd.f32 %v684, %v1278
    %v1301 = vadd.f32 %v689, %v1283
    %v1302 = vtanh.pop %v1286
    %v1303 = vtanh.pop %v1287
    %v1304 = vtanh.pop %v1288
    %v1305 = vtanh.pop %v1289
    %v1306 = vtanh.pop %v1290
    %v1307 = vtanh.pop %v1291
    %v1308 = vtanh.pop %v1292
    %v1309 = vtanh.pop %v1293
    %v1310 = vtanh.pop %v1294
    %v1311 = vtanh.pop %v1295
    %v1312 = vtanh.pop %v1296
    %v1313 = vtanh.pop %v1297
    %v1314 = vtanh.pop %v1298
    %v1315 = vtanh.pop %v1299
    %v1316 = vtanh.pop %v1300
    %v1317 = vtanh.pop %v1301
    %v1318 = vsub.f32 1.0, %v1078
    %v1319 = vsub.f32 1.0, %v1080
    %v1320 = vsub.f32 1.0, %v1082
    %v1321 = vsub.f32 1.0, %v1084
    %v1322 = vsub.f32 1.0, %v1086
    %v1323 = vsub.f32 1.0, %v1088
    %v1324 = vsub.f32 1.0, %v1090
    %v1325 = vsub.f32 1.0, %v1092
    %v1326 = vsub.f32 1.0, %v1094
    %v1327 = vsub.f32 1.0, %v1096
    %v1328 = vsub.f32 1.0, %v1098
    %v1329 = vsub.f32 1.0, %v1100
    %v1330 = vsub.f32 1.0, %v1102
    %v1331 = vsub.f32 1.0, %v1104
    %v1332 = vsub.f32 1.0, %v1106
    %v1333 = vsub.f32 1.0, %v1108
    %v1334 = vmul.f32 %v1318, %v111
    %v1335 = vmul.f32 %v1319, %v112
    %v1336 = vmul.f32 %v1320, %v113
    %v1337 = vmul.f32 %v1321, %v114
    %v1338 = vmul.f32 %v1322, %v115
    %v1339 = vmul.f32 %v1323, %v116
    %v1340 = vmul.f32 %v1324, %v117
    %v1341 = vmul.f32 %v1325, %v118
    %v1342 = vmul.f32 %v1326, %v119
    %v1343 = vmul.f32 %v1327, %v120
    %v1344 = vmul.f32 %v1328, %v121
    %v1345 = vmul.f32 %v1329, %v122
    %v1346 = vmul.f32 %v1330, %v123
    %v1347 = vmul.f32 %v1331, %v124
    %v1348 = vmul.f32 %v1332, %v125
    %v1349 = vmul.f32 %v1333, %v126
    %v1350 = vmul.f32 %v1078, %v1302
    %v1351 = vmul.f32 %v1080, %v1303
    %v1352 = vmul.f32 %v1082, %v1304
    %v1353 = vmul.f32 %v1084, %v1305
    %v1354 = vmul.f32 %v1086, %v1306
    %v1355 = vmul.f32 %v1088, %v1307
    %v1356 = vmul.f32 %v1090, %v1308
    %v1357 = vmul.f32 %v1092, %v1309
    %v1358 = vmul.f32 %v1094, %v1310
    %v1359 = vmul.f32 %v1096, %v1311
    %v1360 = vmul.f32 %v1098, %v1312
    %v1361 = vmul.f32 %v1100, %v1313
    %v1362 = vmul.f32 %v1102, %v1314
    %v1363 = vmul.f32 %v1104, %v1315
    %v1364 = vmul.f32 %v1106, %v1316
    %v1365 = vmul.f32 %v1108, %v1317
    %v1366 = vadd.f32 %v1334, %v1350
    %v1367 = vadd.f32 %v1335, %v1351
    %v1368 = vadd.f32 %v1336, %v1352
    %v1369 = vadd.f32 %v1337, %v1353
    %v1370 = vadd.f32 %v1338, %v1354
    %v1371 = vadd.f32 %v1339, %v1355
    %v1372 = vadd.f32 %v1340, %v1356
    %v1373 = vadd.f32 %v1341, %v1357
    %v1374 = vadd.f32 %v1342, %v1358
    %v1375 = vadd.f32 %v1343, %v1359
    %v1376 = vadd.f32 %v1344, %v1360
    %v1377 = vadd.f32 %v1345, %v1361
    %v1378 = vadd.f32 %v1346, %v1362
    %v1379 = vadd.f32 %v1347, %v1363
    %v1380 = vadd.f32 %v1348, %v1364
    %v1381 = vadd.f32 %v1349, %v1365
    %1382 = vst [vmem:[#allocation11] sm:$0xff] %v1366
    %1383 = vst [vmem:[#allocation11 + $0x8] sm:$0xff] %v1367
    %1384 = vst [vmem:[#allocation11 + $0x10] sm:$0xff] %v1368
    %1385 = vst [vmem:[#allocation11 + $0x18] sm:$0xff] %v1369
    %1386 = vst [vmem:[#allocation11 + $0x20] sm:$0xff] %v1370
    %1387 = vst [vmem:[#allocation11 + $0x28] sm:$0xff] %v1371
    %1388 = vst [vmem:[#allocation11 + $0x30] sm:$0xff] %v1372
    %1389 = vst [vmem:[#allocation11 + $0x38] sm:$0xff] %v1373
    %1390 = vst [vmem:[#allocation11 + $0x40] sm:$0xff] %v1374
    %1391 = vst [vmem:[#allocation11 + $0x48] sm:$0xff] %v1375
    %1392 = vst [vmem:[#allocation11 + $0x50] sm:$0xff] %v1376
    %1393 = vst [vmem:[#allocation11 + $0x58] sm:$0xff] %v1377
    %1394 = vst [vmem:[#allocation11 + $0x60] sm:$0xff] %v1378
    %1395 = vst [vmem:[#allocation11 + $0x68] sm:$0xff] %v1379
    %1396 = vst [vmem:[#allocation11 + $0x70] sm:$0xff] %v1380
    %1397 = vst [vmem:[#allocation11 + $0x78] sm:$0xff] %v1381
    // Predicated region
    $region46: #{tpu_custom_call.1} parent=1 // pred_check
      _
    $region47: #{tpu_custom_call.1} parent=1 // pred_check_branch
      %1399 = sbr.rel (0) target = $region49
    $region48: #{tpu_custom_call.1} parent=1 // pred_region
      %s1401 = ssub.s32 2048, 2048
      %1402 = vsyncadd [#allocation4], %s1401
      %s1403 = sshll.u32 [#allocation11], 4
      %s1404 = int_to_ptr.vmem [resolvable:$true] %s1403
      %1409 = dma.vmem_to_hbm [thread:$0]  %s1404, 2048, %s6, [#allocation4], 128, 128, 8
    $region49: #{tpu_custom_call.1} parent=1 // pred_fallthru
      _
    // Predicated region
    $region50: #{tpu_custom_call.1} parent=1 // pred_check
      _
    $region51: #{tpu_custom_call.1} parent=1 // pred_check_branch
      %1411 = sbr.rel (0) target = $region53
    $region52: #{tpu_custom_call.1} parent=1 // pred_region
      %1412 = dma.done [#allocation4], 2048
    $region53: #{tpu_custom_call.1} parent=1 // pred_fallthru
      _
    %1413 = vsyncpa [#allocation3], 1
    %1414 = vsyncpa [#allocation6], 1
    %1415 = vsyncpa [#allocation9], 1
    %1416 = vsyncpa [#allocation4], 1

</llo_original>
